<compile_context>
chip_gen: v7x
topology: tpu7x:2x2x1
jax: 0.10.0
libtpu: 0.0.40
codegen_flags: <defaults>
</compile_context>

<pallas_src>
import functools

import numpy as np
import jax
import jax.numpy as jnp
from jax.experimental import pallas as pl
from jax.experimental.pallas import tpu as pltpu


# ---------------------------------------------------------------------------
# Config (AttributeEncoder(in_channels=3, latent_dim=32, channels=(16, 32)))
# ---------------------------------------------------------------------------
IN_CH = 3
CHANNELS = (16, 32)
C1, C2 = CHANNELS
LATENT = 32
H_IN = CHANNELS[0]          # input spatial size (16)
H1 = H_IN // 2              # after conv1 (k=4, s=2, p=1) -> 8
H2 = H1 // 2                # after conv2 -> 4
P2 = H2 * H2                # conv2 output positions (16)
TAPS = 16                   # 4x4 kernel taps
K1 = 16 * IN_CH             # conv1 im2col width (48)
KBIG = TAPS * K1            # expanded patch width (768 = 6*128, lane-dense)
H1COLS = TAPS * C1          # conv1 block-diag output width (256)
FLAT = C2 * H2 * H2         # flatten_size (512)
OUT_PAD = 128               # fc output padded to a full lane tile (mu|logvar|zeros)
NEG_SLOPE = 0.2             # nn.LeakyReLU(0.2)
BN_EPS = 1e-5


# ---------------------------------------------------------------------------
# The single fused Pallas kernel: 3 matmuls + f32 epilogues, all in VMEM/vregs
# ---------------------------------------------------------------------------
def _encoder_kernel(patch_ref, w1_ref, b1_ref, w2_ref, b2_ref, wfc_ref, bfc_ref,
                    out_ref, y2_ref, flat_ref, *, batch):
    """Whole AttributeEncoder.forward (eval-BN) in one kernel invocation.

    patch_ref rows are (p2, b); columns are (tap2, i1, j1, cin).  w1_ref is the
    block-diagonal conv1 weight so conv1 over all 16 conv2 taps is ONE matmul
    with output columns (tap2, c1); conv2 is then ONE matmul against w2_ref
    (rows (tap2, c1)).  Conv2 zero-padding is pre-folded into b2_ref (per-row
    effective bias), so no mask multiply is needed.
    """
    # conv1 (+BN fold, bias, LeakyReLU): (P2*B, 768) @ (768, 256)
    h = jnp.dot(patch_ref[...], w1_ref[...], preferred_element_type=jnp.float32)
    h = h + b1_ref[...]                              # (1, 256) broadcast, f32
    h = jnp.where(h > 0, h, NEG_SLOPE * h)           # LeakyReLU(0.2)

    # conv2 (+BN fold, padding-corrected bias, LeakyReLU): (P2*B, 256) @ (256, 32)
    y2 = jnp.dot(h.astype(jnp.bfloat16), w2_ref[...],
                 preferred_element_type=jnp.float32)
    y2 = y2 + b2_ref[...]                            # (P2*B, C2) effective bias
    y2 = jnp.where(y2 > 0, y2, NEG_SLOPE * y2)
    y2_ref[...] = y2                                 # tiny staging buffer for the flatten

    # flatten: rows (p2, b) -> (b, (p2, c2)) via 16 static lane-offset copies
    # into a lane-major (B, 512) scratch (replaces 16 tiny fc matmuls).
    for p2 in range(P2):
        flat_ref[:, p2 * C2:(p2 + 1) * C2] = y2_ref[p2 * batch:(p2 + 1) * batch, :]

    # merged fc_mu | fc_logvar (padded to 128 output lanes): (B, 512) @ (512, 128)
    out_ref[...] = jnp.dot(flat_ref[...].astype(jnp.bfloat16), wfc_ref[...],
                           preferred_element_type=jnp.float32) + bfc_ref[...]


# ---------------------------------------------------------------------------
# One-time weight preparation (hoisted out of the per-call forward)
# ---------------------------------------------------------------------------
def _fold_bn(w, b, bn):
    scale = bn["gamma"] * jax.lax.rsqrt(bn["var"] + BN_EPS)
    shift = bn["beta"] - bn["mean"] * scale
    return w * scale[:, None, None, None], b * scale + shift


def prepare_params(params, batch):
    """Fold BN, build the block-diag conv1 weight, fold conv2 zero-padding into
    an effective bias, permute/merge/pad the fc weights, cast to bf16.
    Call once per batch size (the kernel is batch-specialized anyway)."""
    w1, b1 = _fold_bn(params["conv1"]["w"], params["conv1"]["b"], params["conv1"]["bn"])
    w2, b2 = _fold_bn(params["conv2"]["w"], params["conv2"]["b"], params["conv2"]["bn"])

    # conv1: (Cout, Cin, kh, kw) -> (kh*kw*Cin, Cout) rows (i1, j1, cin), then
    # block-diagonal over conv2 taps -> (768, 256), output cols (tap2, c1).
    w1m = w1.transpose(2, 3, 1, 0).reshape(K1, C1)
    w1bd = jnp.kron(jnp.eye(TAPS, dtype=w1m.dtype), w1m).astype(jnp.bfloat16)
    b1t = jnp.tile(b1, TAPS).reshape(1, H1COLS).astype(jnp.float32)

    # conv2: (Cout, Cin, kh, kw) -> (kh*kw*Cin, Cout) rows (tap2=(i2,j2), c1)
    w2m = w2.transpose(2, 3, 1, 0).reshape(TAPS * C1, C2).astype(jnp.bfloat16)

    # Fold the conv2 zero-padding into the bias: for padding taps the block-diag
    # conv1 sees zero patch columns, so it produces lrelu(b1) instead of 0; subtract
    # lrelu(b1) @ w2[tap] for every (p2, tap) that reads conv2 padding.
    pad_mask = np.zeros((P2, TAPS), np.float32)
    for i2 in range(4):
        for j2 in range(4):
            for h2 in range(H2):
                for w2s in range(H2):
                    qh, qw = 2 * h2 - 1 + i2, 2 * w2s - 1 + j2
                    if not (0 <= qh < H1 and 0 <= qw < H1):
                        pad_mask[h2 * H2 + w2s, i2 * 4 + j2] = 1.0
    b1_act = jnp.where(b1 > 0, b1, NEG_SLOPE * b1).astype(jnp.bfloat16).astype(jnp.float32)
    tap_contrib = jnp.einsum("c,tcd->td", b1_act,
                             w2m.astype(jnp.float32).reshape(TAPS, C1, C2))   # (TAPS, C2)
    b2_eff = b2[None, :] - jnp.asarray(pad_mask) @ tap_contrib                # (P2, C2)
    b2_eff = jnp.repeat(b2_eff, batch, axis=0).astype(jnp.float32)            # rows (p2, b)

    # fc: PyTorch Linear weight (out, in) with `in` flattened NCHW (c2, h2, w2);
    # permute rows to the kernel's (p2=(h2,w2), c2) flatten order, merge mu|logvar,
    # zero-pad the output dim to 128 lanes (unmasked stores).
    def fc_rows(w):
        return w.reshape(LATENT, C2, H2, H2).transpose(2, 3, 1, 0).reshape(FLAT, LATENT)

    wfc = jnp.concatenate([fc_rows(params["fc_mu"]["w"]),
                           fc_rows(params["fc_logvar"]["w"])], axis=1)
    wfc = jnp.pad(wfc, ((0, 0), (0, OUT_PAD - 2 * LATENT))).astype(jnp.bfloat16)
    bfc = jnp.concatenate([params["fc_mu"]["b"], params["fc_logvar"]["b"]])
    bfc = jnp.pad(bfc, (0, OUT_PAD - 2 * LATENT)).reshape(1, OUT_PAD).astype(jnp.float32)

    return dict(w1bd=w1bd, b1t=b1t, w2m=w2m, b2eff=b2_eff, wfc=wfc, bfc=bfc)


# ---------------------------------------------------------------------------
# Per-call glue: expanded conv1 patch matrix, rows (p2, b), cols (tap2, i1, j1, cin)
# ---------------------------------------------------------------------------
def _build_patches(x):
    """x: (B, Cin, H, H) NCHW -> (P2*B, 768) bf16 lane-dense patch slab."""
    B = x.shape[0]
    xh = jnp.transpose(x, (0, 2, 3, 1))                             # NHWC
    xp = jnp.pad(xh, ((0, 0), (1, 1), (1, 1), (0, 0)))              # conv1 padding=1
    # conv1 im2col over its full H1 x H1 grid; columns ordered (i1, j1, cin)
    cols = [xp[:, i:i + 2 * H1 - 1:2, j:j + 2 * H1 - 1:2, :]
            for i in range(4) for j in range(4)]
    p1 = jnp.concatenate(cols, axis=-1)                             # (B, H1, H1, K1)
    # conv2 padding=1 halo on conv1's output grid (zeros; bias correction folds
    # the resulting lrelu(b1)@w2 term away in-kernel)
    p1p = jnp.pad(p1, ((0, 0), (1, 1), (1, 1), (0, 0)))             # (B, H1+2, H1+2, K1)
    # for each conv2 tap (i2, j2), the conv1 patch it needs per output position
    taps = [p1p[:, i:i + 2 * H2 - 1:2, j:j + 2 * H2 - 1:2, :]
            for i in range(4) for j in range(4)]
    e = jnp.concatenate(taps, axis=-1)                              # (B, H2, H2, 768)
    e = jnp.transpose(e, (1, 2, 0, 3)).reshape(P2 * B, KBIG)        # rows (p2, b)
    return e.astype(jnp.bfloat16)


# ---------------------------------------------------------------------------
# forward / reparameterize
# ---------------------------------------------------------------------------
@jax.jit
def forward(prepped, x):
    """Returns (mu, logvar) — AttributeEncoder.forward with eval-BN semantics.
    `prepped` must come from prepare_params(params, batch=x.shape[0])."""
    batch = x.shape[0]
    patches = _build_patches(x)

    vspec = pl.BlockSpec(memory_space=pltpu.MemorySpace.VMEM)
    out = pl.pallas_call(
        functools.partial(_encoder_kernel, batch=batch),
        out_shape=jax.ShapeDtypeStruct((batch, OUT_PAD), jnp.float32),
        in_specs=[vspec] * 7,
        out_specs=vspec,
        scratch_shapes=[pltpu.VMEM((P2 * batch, C2), jnp.float32),   # conv2 output (p2,b)
                        pltpu.VMEM((batch, FLAT), jnp.float32)],     # flattened (b, p2*c2)
    )(patches, prepped["w1bd"], prepped["b1t"], prepped["w2m"],
      prepped["b2eff"], prepped["wfc"], prepped["bfc"])

    return out[:, :LATENT], out[:, LATENT:2 * LATENT]


def reparameterize(mu, logvar, eps):
    # Module method (not part of forward).  64 floats — a dedicated pallas_call
    # would be pure launch overhead, so plain jnp is used.
    return mu + eps * jnp.exp(0.5 * logvar)


# ---------------------------------------------------------------------------
# Pure-JAX reference (f32) used as a correctness check
# ---------------------------------------------------------------------------
def _reference_forward(params, x):
    def conv_bn_lrelu(h, layer):
        w, b, bn = layer["w"], layer["b"], layer["bn"]
        scale = bn["gamma"] * jax.lax.rsqrt(bn["var"] + BN_EPS)
        shift = bn["beta"] - bn["mean"] * scale
        y = jax.lax.conv_general_dilated(
            h, w, window_strides=(2, 2), padding=((1, 1), (1, 1)),
            dimension_numbers=("NCHW", "OIHW", "NCHW"))
        y = y + b[None, :, None, None]
        y = y * scale[None, :, None, None] + shift[None, :, None, None]
        return jnp.where(y > 0, y, NEG_SLOPE * y)

    h = conv_bn_lrelu(x, params["conv1"])
    h = conv_bn_lrelu(h, params["conv2"])
    hf = h.reshape(x.shape[0], -1)
    mu = hf @ params["fc_mu"]["w"].T + params["fc_mu"]["b"]
    logvar = hf @ params["fc_logvar"]["w"].T + params["fc_logvar"]["b"]
    return mu, logvar


# ---------------------------------------------------------------------------
# Parameter init (PyTorch-shaped, synthetic)
# ---------------------------------------------------------------------------
def init_params(key):
    ks = jax.random.split(key, 4)

    def rnd(k, shape, scale=0.05):
        return scale * jax.random.normal(k, shape, jnp.float32)

    def bn(ch):
        return dict(gamma=jnp.ones((ch,), jnp.float32), beta=jnp.zeros((ch,), jnp.float32),
                    mean=jnp.zeros((ch,), jnp.float32), var=jnp.ones((ch,), jnp.float32))

    return dict(
        conv1=dict(w=rnd(ks[0], (C1, IN_CH, 4, 4)), b=jnp.zeros((C1,), jnp.float32), bn=bn(C1)),
        conv2=dict(w=rnd(ks[1], (C2, C1, 4, 4)), b=jnp.zeros((C2,), jnp.float32), bn=bn(C2)),
        fc_mu=dict(w=rnd(ks[2], (LATENT, FLAT)), b=jnp.zeros((LATENT,), jnp.float32)),
        fc_logvar=dict(w=rnd(ks[3], (LATENT, FLAT)), b=jnp.zeros((LATENT,), jnp.float32)),
    )


# ---------------------------------------------------------------------------
if __name__ == "__main__":
    key = jax.random.PRNGKey(0)
    pkey, xkey, ekey = jax.random.split(key, 3)
    params = init_params(pkey)

    B = 2
    x = jax.random.normal(xkey, (B, IN_CH, H_IN, H_IN), jnp.float32)

    prepped = prepare_params(params, batch=B)      # one-time weight folding (hoisted)

    mu, logvar = forward(prepped, x)
    mu, logvar = jax.block_until_ready((mu, logvar))

    # correctness check against a pure-JAX f32 reference (bf16 tolerance)
    mu_ref, logvar_ref = _reference_forward(params, x)
    assert jnp.allclose(mu, mu_ref, atol=3e-2, rtol=3e-2)
    assert jnp.allclose(logvar, logvar_ref, atol=3e-2, rtol=3e-2)

    eps = jax.random.normal(ekey, (B, LATENT), jnp.float32)
    z = reparameterize(mu, logvar, eps)

    assert mu.shape == (B, LATENT) and logvar.shape == (B, LATENT)
    assert z.shape == (B, LATENT)
    assert bool(jnp.all(jnp.isfinite(mu)))
    assert bool(jnp.all(jnp.isfinite(logvar)))
    assert bool(jnp.all(jnp.isfinite(z)))
    print("KERNEL_OK")
</pallas_src>

<mosaic_0001>
module attributes {stable_mosaic.version = 11 : i64} {
  func.func @_encoder_kernel(%arg0: memref<32x768xbf16, #tpu.memory_space<vmem>>, %arg1: memref<768x256xbf16, #tpu.memory_space<vmem>>, %arg2: memref<1x256xf32, #tpu.memory_space<vmem>>, %arg3: memref<256x32xbf16, #tpu.memory_space<vmem>>, %arg4: memref<32x32xf32, #tpu.memory_space<vmem>>, %arg5: memref<512x128xbf16, #tpu.memory_space<vmem>>, %arg6: memref<1x128xf32, #tpu.memory_space<vmem>>, %arg7: memref<2x128xf32, #tpu.memory_space<vmem>>, %arg8: memref<32x32xf32, #tpu.memory_space<vmem>>, %arg9: memref<2x512xf32, #tpu.memory_space<vmem>>) attributes {dimension_semantics = [], scalar_prefetch = 0 : i64, scratch_operands = 2 : i64, tpu.core_type = #tpu.core_type<tc>} {
    %c0 = arith.constant 0 : index
    %c0_0 = arith.constant 0 : index
    %0 = vector.load %arg0[%c0, %c0_0] : memref<32x768xbf16, #tpu.memory_space<vmem>>, vector<32x768xbf16>
    %c0_1 = arith.constant 0 : index
    %c0_2 = arith.constant 0 : index
    %1 = vector.load %arg1[%c0_1, %c0_2] : memref<768x256xbf16, #tpu.memory_space<vmem>>, vector<768x256xbf16>
    %cst = arith.constant dense<0.000000e+00> : vector<32x256xf32>
    %2 = tpu.matmul %0, %1, %cst {dimension_numbers = #tpu.dot_dimension_numbers<[1], [0], [0], [1], [0, 0, 1, 1], [], []>} : vector<32x768xbf16>, vector<768x256xbf16>, vector<32x256xf32> -> vector<32x256xf32>
    %c0_3 = arith.constant 0 : index
    %c0_4 = arith.constant 0 : index
    %3 = vector.load %arg2[%c0_3, %c0_4] : memref<1x256xf32, #tpu.memory_space<vmem>>, vector<1x256xf32>
    %4 = vector.broadcast %3 : vector<1x256xf32> to vector<32x256xf32>
    %5 = arith.addf %2, %4 : vector<32x256xf32>
    %cst_5 = arith.constant 0.000000e+00 : f32
    %6 = vector.broadcast %cst_5 : f32 to vector<32x256xf32>
    %7 = arith.cmpf ogt, %5, %6 : vector<32x256xf32>
    %cst_6 = arith.constant 2.000000e-01 : f32
    %8 = vector.broadcast %cst_6 : f32 to vector<32x256xf32>
    %9 = arith.mulf %8, %5 : vector<32x256xf32>
    %10 = arith.select %7, %5, %9 : vector<32x256xi1>, vector<32x256xf32>
    %11 = arith.truncf %10 : vector<32x256xf32> to vector<32x256xbf16>
    %c0_7 = arith.constant 0 : index
    %c0_8 = arith.constant 0 : index
    %12 = vector.load %arg3[%c0_7, %c0_8] : memref<256x32xbf16, #tpu.memory_space<vmem>>, vector<256x32xbf16>
    %cst_9 = arith.constant dense<0.000000e+00> : vector<32x32xf32>
    %13 = tpu.matmul %11, %12, %cst_9 {dimension_numbers = #tpu.dot_dimension_numbers<[1], [0], [0], [1], [0, 0, 1, 1], [], []>} : vector<32x256xbf16>, vector<256x32xbf16>, vector<32x32xf32> -> vector<32x32xf32>
    %c0_10 = arith.constant 0 : index
    %c0_11 = arith.constant 0 : index
    %14 = vector.load %arg4[%c0_10, %c0_11] : memref<32x32xf32, #tpu.memory_space<vmem>>, vector<32x32xf32>
    %15 = arith.addf %13, %14 : vector<32x32xf32>
    %cst_12 = arith.constant 0.000000e+00 : f32
    %16 = vector.broadcast %cst_12 : f32 to vector<32x32xf32>
    %17 = arith.cmpf ogt, %15, %16 : vector<32x32xf32>
    %cst_13 = arith.constant 2.000000e-01 : f32
    %18 = vector.broadcast %cst_13 : f32 to vector<32x32xf32>
    %19 = arith.mulf %18, %15 : vector<32x32xf32>
    %20 = arith.select %17, %15, %19 : vector<32x32xi1>, vector<32x32xf32>
    %c0_14 = arith.constant 0 : index
    %c0_15 = arith.constant 0 : index
    %21 = vector.load %arg8[%c0_14, %c0_15] : memref<32x32xf32, #tpu.memory_space<vmem>>, vector<32x32xf32>
    tpu.vector_store %arg8[%c0_14, %c0_15], %20 {strides = array<i32>} : memref<32x32xf32, #tpu.memory_space<vmem>>, vector<32x32xf32>,
    %c0_16 = arith.constant 0 : index
    %c0_17 = arith.constant 0 : index
    %22 = vector.load %arg8[%c0_16, %c0_17] : memref<32x32xf32, #tpu.memory_space<vmem>>, vector<2x32xf32>
    %c0_18 = arith.constant 0 : index
    %c0_19 = arith.constant 0 : index
    %23 = vector.load %arg9[%c0_18, %c0_19] : memref<2x512xf32, #tpu.memory_space<vmem>>, vector<2x32xf32>
    tpu.vector_store %arg9[%c0_18, %c0_19], %22 {strides = array<i32>} : memref<2x512xf32, #tpu.memory_space<vmem>>, vector<2x32xf32>,
    %c2 = arith.constant 2 : index
    %c0_20 = arith.constant 0 : index
    %24 = vector.load %arg8[%c2, %c0_20] : memref<32x32xf32, #tpu.memory_space<vmem>>, vector<2x32xf32>
    %c0_21 = arith.constant 0 : index
    %c32 = arith.constant 32 : index
    %25 = vector.load %arg9[%c0_21, %c32] : memref<2x512xf32, #tpu.memory_space<vmem>>, vector<2x32xf32>
    tpu.vector_store %arg9[%c0_21, %c32], %24 {strides = array<i32>} : memref<2x512xf32, #tpu.memory_space<vmem>>, vector<2x32xf32>,
    %c4 = arith.constant 4 : index
    %c0_22 = arith.constant 0 : index
    %26 = vector.load %arg8[%c4, %c0_22] : memref<32x32xf32, #tpu.memory_space<vmem>>, vector<2x32xf32>
    %c0_23 = arith.constant 0 : index
    %c64 = arith.constant 64 : index
    %27 = vector.load %arg9[%c0_23, %c64] : memref<2x512xf32, #tpu.memory_space<vmem>>, vector<2x32xf32>
    tpu.vector_store %arg9[%c0_23, %c64], %26 {strides = array<i32>} : memref<2x512xf32, #tpu.memory_space<vmem>>, vector<2x32xf32>,
    %c6 = arith.constant 6 : index
    %c0_24 = arith.constant 0 : index
    %28 = vector.load %arg8[%c6, %c0_24] : memref<32x32xf32, #tpu.memory_space<vmem>>, vector<2x32xf32>
    %c0_25 = arith.constant 0 : index
    %c96 = arith.constant 96 : index
    %29 = vector.load %arg9[%c0_25, %c96] : memref<2x512xf32, #tpu.memory_space<vmem>>, vector<2x32xf32>
    tpu.vector_store %arg9[%c0_25, %c96], %28 {strides = array<i32>} : memref<2x512xf32, #tpu.memory_space<vmem>>, vector<2x32xf32>,
    %c8 = arith.constant 8 : index
    %c0_26 = arith.constant 0 : index
    %30 = vector.load %arg8[%c8, %c0_26] : memref<32x32xf32, #tpu.memory_space<vmem>>, vector<2x32xf32>
    %c0_27 = arith.constant 0 : index
    %c128 = arith.constant 128 : index
    %31 = vector.load %arg9[%c0_27, %c128] : memref<2x512xf32, #tpu.memory_space<vmem>>, vector<2x32xf32>
    tpu.vector_store %arg9[%c0_27, %c128], %30 {strides = array<i32>} : memref<2x512xf32, #tpu.memory_space<vmem>>, vector<2x32xf32>,
    %c10 = arith.constant 10 : index
    %c0_28 = arith.constant 0 : index
    %32 = vector.load %arg8[%c10, %c0_28] : memref<32x32xf32, #tpu.memory_space<vmem>>, vector<2x32xf32>
    %c0_29 = arith.constant 0 : index
    %c160 = arith.constant 160 : index
    %33 = vector.load %arg9[%c0_29, %c160] : memref<2x512xf32, #tpu.memory_space<vmem>>, vector<2x32xf32>
    tpu.vector_store %arg9[%c0_29, %c160], %32 {strides = array<i32>} : memref<2x512xf32, #tpu.memory_space<vmem>>, vector<2x32xf32>,
    %c12 = arith.constant 12 : index
    %c0_30 = arith.constant 0 : index
    %34 = vector.load %arg8[%c12, %c0_30] : memref<32x32xf32, #tpu.memory_space<vmem>>, vector<2x32xf32>
    %c0_31 = arith.constant 0 : index
    %c192 = arith.constant 192 : index
    %35 = vector.load %arg9[%c0_31, %c192] : memref<2x512xf32, #tpu.memory_space<vmem>>, vector<2x32xf32>
    tpu.vector_store %arg9[%c0_31, %c192], %34 {strides = array<i32>} : memref<2x512xf32, #tpu.memory_space<vmem>>, vector<2x32xf32>,
    %c14 = arith.constant 14 : index
    %c0_32 = arith.constant 0 : index
    %36 = vector.load %arg8[%c14, %c0_32] : memref<32x32xf32, #tpu.memory_space<vmem>>, vector<2x32xf32>
    %c0_33 = arith.constant 0 : index
    %c224 = arith.constant 224 : index
    %37 = vector.load %arg9[%c0_33, %c224] : memref<2x512xf32, #tpu.memory_space<vmem>>, vector<2x32xf32>
    tpu.vector_store %arg9[%c0_33, %c224], %36 {strides = array<i32>} : memref<2x512xf32, #tpu.memory_space<vmem>>, vector<2x32xf32>,
    %c16 = arith.constant 16 : index
    %c0_34 = arith.constant 0 : index
    %38 = vector.load %arg8[%c16, %c0_34] : memref<32x32xf32, #tpu.memory_space<vmem>>, vector<2x32xf32>
    %c0_35 = arith.constant 0 : index
    %c256 = arith.constant 256 : index
    %39 = vector.load %arg9[%c0_35, %c256] : memref<2x512xf32, #tpu.memory_space<vmem>>, vector<2x32xf32>
    tpu.vector_store %arg9[%c0_35, %c256], %38 {strides = array<i32>} : memref<2x512xf32, #tpu.memory_space<vmem>>, vector<2x32xf32>,
    %c18 = arith.constant 18 : index
    %c0_36 = arith.constant 0 : index
    %40 = vector.load %arg8[%c18, %c0_36] : memref<32x32xf32, #tpu.memory_space<vmem>>, vector<2x32xf32>
    %c0_37 = arith.constant 0 : index
    %c288 = arith.constant 288 : index
    %41 = vector.load %arg9[%c0_37, %c288] : memref<2x512xf32, #tpu.memory_space<vmem>>, vector<2x32xf32>
    tpu.vector_store %arg9[%c0_37, %c288], %40 {strides = array<i32>} : memref<2x512xf32, #tpu.memory_space<vmem>>, vector<2x32xf32>,
    %c20 = arith.constant 20 : index
    %c0_38 = arith.constant 0 : index
    %42 = vector.load %arg8[%c20, %c0_38] : memref<32x32xf32, #tpu.memory_space<vmem>>, vector<2x32xf32>
    %c0_39 = arith.constant 0 : index
    %c320 = arith.constant 320 : index
    %43 = vector.load %arg9[%c0_39, %c320] : memref<2x512xf32, #tpu.memory_space<vmem>>, vector<2x32xf32>
    tpu.vector_store %arg9[%c0_39, %c320], %42 {strides = array<i32>} : memref<2x512xf32, #tpu.memory_space<vmem>>, vector<2x32xf32>,
    %c22 = arith.constant 22 : index
    %c0_40 = arith.constant 0 : index
    %44 = vector.load %arg8[%c22, %c0_40] : memref<32x32xf32, #tpu.memory_space<vmem>>, vector<2x32xf32>
    %c0_41 = arith.constant 0 : index
    %c352 = arith.constant 352 : index
    %45 = vector.load %arg9[%c0_41, %c352] : memref<2x512xf32, #tpu.memory_space<vmem>>, vector<2x32xf32>
    tpu.vector_store %arg9[%c0_41, %c352], %44 {strides = array<i32>} : memref<2x512xf32, #tpu.memory_space<vmem>>, vector<2x32xf32>,
    %c24 = arith.constant 24 : index
    %c0_42 = arith.constant 0 : index
    %46 = vector.load %arg8[%c24, %c0_42] : memref<32x32xf32, #tpu.memory_space<vmem>>, vector<2x32xf32>
    %c0_43 = arith.constant 0 : index
    %c384 = arith.constant 384 : index
    %47 = vector.load %arg9[%c0_43, %c384] : memref<2x512xf32, #tpu.memory_space<vmem>>, vector<2x32xf32>
    tpu.vector_store %arg9[%c0_43, %c384], %46 {strides = array<i32>} : memref<2x512xf32, #tpu.memory_space<vmem>>, vector<2x32xf32>,
    %c26 = arith.constant 26 : index
    %c0_44 = arith.constant 0 : index
    %48 = vector.load %arg8[%c26, %c0_44] : memref<32x32xf32, #tpu.memory_space<vmem>>, vector<2x32xf32>
    %c0_45 = arith.constant 0 : index
    %c416 = arith.constant 416 : index
    %49 = vector.load %arg9[%c0_45, %c416] : memref<2x512xf32, #tpu.memory_space<vmem>>, vector<2x32xf32>
    tpu.vector_store %arg9[%c0_45, %c416], %48 {strides = array<i32>} : memref<2x512xf32, #tpu.memory_space<vmem>>, vector<2x32xf32>,
    %c28 = arith.constant 28 : index
    %c0_46 = arith.constant 0 : index
    %50 = vector.load %arg8[%c28, %c0_46] : memref<32x32xf32, #tpu.memory_space<vmem>>, vector<2x32xf32>
    %c0_47 = arith.constant 0 : index
    %c448 = arith.constant 448 : index
    %51 = vector.load %arg9[%c0_47, %c448] : memref<2x512xf32, #tpu.memory_space<vmem>>, vector<2x32xf32>
    tpu.vector_store %arg9[%c0_47, %c448], %50 {strides = array<i32>} : memref<2x512xf32, #tpu.memory_space<vmem>>, vector<2x32xf32>,
    %c30 = arith.constant 30 : index
    %c0_48 = arith.constant 0 : index
    %52 = vector.load %arg8[%c30, %c0_48] : memref<32x32xf32, #tpu.memory_space<vmem>>, vector<2x32xf32>
    %c0_49 = arith.constant 0 : index
    %c480 = arith.constant 480 : index
    %53 = vector.load %arg9[%c0_49, %c480] : memref<2x512xf32, #tpu.memory_space<vmem>>, vector<2x32xf32>
    tpu.vector_store %arg9[%c0_49, %c480], %52 {strides = array<i32>} : memref<2x512xf32, #tpu.memory_space<vmem>>, vector<2x32xf32>,
    %c0_50 = arith.constant 0 : index
    %c0_51 = arith.constant 0 : index
    %54 = vector.load %arg9[%c0_50, %c0_51] : memref<2x512xf32, #tpu.memory_space<vmem>>, vector<2x512xf32>
    %55 = arith.truncf %54 : vector<2x512xf32> to vector<2x512xbf16>
    %c0_52 = arith.constant 0 : index
    %c0_53 = arith.constant 0 : index
    %56 = vector.load %arg5[%c0_52, %c0_53] : memref<512x128xbf16, #tpu.memory_space<vmem>>, vector<512x128xbf16>
    %cst_54 = arith.constant dense<0.000000e+00> : vector<2x128xf32>
    %57 = tpu.matmul %55, %56, %cst_54 {dimension_numbers = #tpu.dot_dimension_numbers<[1], [0], [0], [1], [0, 0, 1, 1], [], []>} : vector<2x512xbf16>, vector<512x128xbf16>, vector<2x128xf32> -> vector<2x128xf32>
    %c0_55 = arith.constant 0 : index
    %c0_56 = arith.constant 0 : index
    %58 = vector.load %arg6[%c0_55, %c0_56] : memref<1x128xf32, #tpu.memory_space<vmem>>, vector<1x128xf32>
    %59 = vector.broadcast %58 : vector<1x128xf32> to vector<2x128xf32>
    %60 = arith.addf %57, %59 : vector<2x128xf32>
    %c0_57 = arith.constant 0 : index
    %c0_58 = arith.constant 0 : index
    %61 = vector.load %arg7[%c0_57, %c0_58] : memref<2x128xf32, #tpu.memory_space<vmem>>, vector<2x128xf32>
    tpu.vector_store %arg7[%c0_57, %c0_58], %60 {strides = array<i32>} : memref<2x128xf32, #tpu.memory_space<vmem>>, vector<2x128xf32>,
    return
  }
}

</mosaic_0001>

<llo_original>
// kernel: forward.1
$region0: #{forward.1}
  #allocation0 [shape = 'u32[]', space=smem, size = 0x4, offset = 0x4, fixed_abs, tag = 'smem constant byte address 0x4 - core index']
  #allocation1 [shape = 'u32[144,128]{1,0:T(1,128)}', space=vmem, size = 0x12000, scoped, tag = 'internal scratch']
  #allocation2 [shape = 'f32[32,32]{1,0:T(8,128)}', space=vmem, size = 0x4000, scoped, tag = 'scratch operand']
  #allocation3 [shape = 'f32[2,512]{1,0:T(2,128)}', space=vmem, size = 0x1000, scoped, tag = 'scratch operand']
  %s0 = inlined_call_operand.vmem [shape: bf16[32,768], index: 0, kind: input, shape index: {}]
  %s1 = inlined_call_operand.vmem [shape: bf16[768,256], index: 1, kind: input, shape index: {}]
  %s2 = inlined_call_operand.vmem [shape: f32[1,256], index: 2, kind: input, shape index: {}]
  %s3 = inlined_call_operand.vmem [shape: bf16[256,32], index: 3, kind: input, shape index: {}]
  %s4 = inlined_call_operand.vmem [shape: f32[32,32], index: 4, kind: input, shape index: {}]
  %s5 = inlined_call_operand.vmem [shape: bf16[512,128], index: 5, kind: input, shape index: {}]
  %s6 = inlined_call_operand.vmem [shape: f32[1,128], index: 6, kind: input, shape index: {}]
  %s7 = inlined_call_operand.vmem [shape: f32[2,128], index: 7, kind: output, shape index: {}]
  %s8 = sld [smem:[#allocation0]]
  $region38: #{forward.1} parent=0
    _
  %s10 = ssub.s32 1, %s8
  %s11 = scalar_select 0, %s10, %s8
  // Predicated region
  $region2: #{forward.1} parent=0 // pred_check
    _
  $region3: #{forward.1} parent=0 // pred_check_branch
    %13 = sbr.rel (0) target = $region5
  $region4: #{forward.1} parent=0 // pred_region
    _
  $region5: #{forward.1} parent=0 // pred_fallthru
    _
  // Predicated region
  $region6: #{forward.1} parent=0 // pred_check
    _
  $region7: #{forward.1} parent=0 // pred_check_branch
    %15 = sbr.rel (0) target = $region9
  $region8: #{forward.1} parent=0 // pred_region
    _
  $region9: #{forward.1} parent=0 // pred_fallthru
    _
  // Predicated region
  $region10: #{forward.1} parent=0 // pred_check
    _
  $region11: #{forward.1} parent=0 // pred_check_branch
    %17 = sbr.rel (0) target = $region13
  $region12: #{forward.1} parent=0 // pred_region
    _
  $region13: #{forward.1} parent=0 // pred_fallthru
    _
  // Predicated region
  $region14: #{forward.1} parent=0 // pred_check
    _
  $region15: #{forward.1} parent=0 // pred_check_branch
    %19 = sbr.rel (0) target = $region17
  $region16: #{forward.1} parent=0 // pred_region
    _
  $region17: #{forward.1} parent=0 // pred_fallthru
    _
  // Predicated region
  $region18: #{forward.1} parent=0 // pred_check
    _
  $region19: #{forward.1} parent=0 // pred_check_branch
    %21 = sbr.rel (0) target = $region21
  $region20: #{forward.1} parent=0 // pred_region
    _
  $region21: #{forward.1} parent=0 // pred_fallthru
    _
  // Predicated region
  $region22: #{forward.1} parent=0 // pred_check
    _
  $region23: #{forward.1} parent=0 // pred_check_branch
    %23 = sbr.rel (0) target = $region25
  $region24: #{forward.1} parent=0 // pred_region
    _
  $region25: #{forward.1} parent=0 // pred_fallthru
    _
  // Predicated region
  $region26: #{forward.1} parent=0 // pred_check
    _
  $region27: #{forward.1} parent=0 // pred_check_branch
    %25 = sbr.rel (0) target = $region29
  $region28: #{forward.1} parent=0 // pred_region
    _
  $region29: #{forward.1} parent=0 // pred_fallthru
    _
  %v27 = vld [vmem:[%s0] sm:$0xff]
  %v28 = vld [vmem:[%s0 + $0x8] sm:$0xff]
  %v29 = vld [vmem:[%s0 + $0x10] sm:$0xff]
  %v30 = vld [vmem:[%s0 + $0x18] sm:$0xff]
  %v31 = vld [vmem:[%s0 + $0x20] sm:$0xff]
  %v32 = vld [vmem:[%s0 + $0x28] sm:$0xff]
  %v33 = vld [vmem:[%s0 + $0x30] sm:$0xff]
  %v34 = vld [vmem:[%s0 + $0x38] sm:$0xff]
  %v35 = vld [vmem:[%s0 + $0x40] sm:$0xff]
  %v36 = vld [vmem:[%s0 + $0x48] sm:$0xff]
  %v37 = vld [vmem:[%s0 + $0x50] sm:$0xff]
  %v38 = vld [vmem:[%s0 + $0x58] sm:$0xff]
  %v39 = vld [vmem:[%s1] sm:$0xff]
  %v40 = vld [vmem:[%s1 + $0x8] sm:$0xff]
  %v41 = vld [vmem:[%s1 + $0x10] sm:$0xff]
  %v42 = vld [vmem:[%s1 + $0x18] sm:$0xff]
  %v43 = vld [vmem:[%s1 + $0x20] sm:$0xff]
  %v44 = vld [vmem:[%s1 + $0x28] sm:$0xff]
  %v45 = vld [vmem:[%s1 + $0x30] sm:$0xff]
  %v46 = vld [vmem:[%s1 + $0x38] sm:$0xff]
  %v47 = vld [vmem:[%s1 + $0x40] sm:$0xff]
  %v48 = vld [vmem:[%s1 + $0x48] sm:$0xff]
  %v49 = vld [vmem:[%s1 + $0x50] sm:$0xff]
  %v50 = vld [vmem:[%s1 + $0x58] sm:$0xff]
  %v51 = vld [vmem:[%s1 + $0x60] sm:$0xff]
  %v52 = vld [vmem:[%s1 + $0x68] sm:$0xff]
  %v53 = vld [vmem:[%s1 + $0x70] sm:$0xff]
  %v54 = vld [vmem:[%s1 + $0x78] sm:$0xff]
  %v55 = vld [vmem:[%s1 + $0x80] sm:$0xff]
  %v56 = vld [vmem:[%s1 + $0x88] sm:$0xff]
  %v57 = vld [vmem:[%s1 + $0x90] sm:$0xff]
  %v58 = vld [vmem:[%s1 + $0x98] sm:$0xff]
  %v59 = vld [vmem:[%s1 + $0xa0] sm:$0xff]
  %v60 = vld [vmem:[%s1 + $0xa8] sm:$0xff]
  %v61 = vld [vmem:[%s1 + $0xb0] sm:$0xff]
  %v62 = vld [vmem:[%s1 + $0xb8] sm:$0xff]
  %v63 = vld [vmem:[%s1 + $0xc0] sm:$0xff]
  %v64 = vld [vmem:[%s1 + $0xc8] sm:$0xff]
  %v65 = vld [vmem:[%s1 + $0xd0] sm:$0xff]
  %v66 = vld [vmem:[%s1 + $0xd8] sm:$0xff]
  %v67 = vld [vmem:[%s1 + $0xe0] sm:$0xff]
  %v68 = vld [vmem:[%s1 + $0xe8] sm:$0xff]
  %v69 = vld [vmem:[%s1 + $0xf0] sm:$0xff]
  %v70 = vld [vmem:[%s1 + $0xf8] sm:$0xff]
  %v71 = vld [vmem:[%s1 + $0x100] sm:$0xff]
  %v72 = vld [vmem:[%s1 + $0x108] sm:$0xff]
  %v73 = vld [vmem:[%s1 + $0x110] sm:$0xff]
  %v74 = vld [vmem:[%s1 + $0x118] sm:$0xff]
  %v75 = vld [vmem:[%s1 + $0x120] sm:$0xff]
  %v76 = vld [vmem:[%s1 + $0x128] sm:$0xff]
  %v77 = vld [vmem:[%s1 + $0x130] sm:$0xff]
  %v78 = vld [vmem:[%s1 + $0x138] sm:$0xff]
  %v79 = vld [vmem:[%s1 + $0x140] sm:$0xff]
  %v80 = vld [vmem:[%s1 + $0x148] sm:$0xff]
  %v81 = vld [vmem:[%s1 + $0x150] sm:$0xff]
  %v82 = vld [vmem:[%s1 + $0x158] sm:$0xff]
  %v83 = vld [vmem:[%s1 + $0x160] sm:$0xff]
  %v84 = vld [vmem:[%s1 + $0x168] sm:$0xff]
  %v85 = vld [vmem:[%s1 + $0x170] sm:$0xff]
  %v86 = vld [vmem:[%s1 + $0x178] sm:$0xff]
  %v87 = vld [vmem:[%s1 + $0x180] sm:$0xff]
  %v88 = vld [vmem:[%s1 + $0x188] sm:$0xff]
  %v89 = vld [vmem:[%s1 + $0x190] sm:$0xff]
  %v90 = vld [vmem:[%s1 + $0x198] sm:$0xff]
  %v91 = vld [vmem:[%s1 + $0x1a0] sm:$0xff]
  %v92 = vld [vmem:[%s1 + $0x1a8] sm:$0xff]
  %v93 = vld [vmem:[%s1 + $0x1b0] sm:$0xff]
  %v94 = vld [vmem:[%s1 + $0x1b8] sm:$0xff]
  %v95 = vld [vmem:[%s1 + $0x1c0] sm:$0xff]
  %v96 = vld [vmem:[%s1 + $0x1c8] sm:$0xff]
  %v97 = vld [vmem:[%s1 + $0x1d0] sm:$0xff]
  %v98 = vld [vmem:[%s1 + $0x1d8] sm:$0xff]
  %v99 = vld [vmem:[%s1 + $0x1e0] sm:$0xff]
  %v100 = vld [vmem:[%s1 + $0x1e8] sm:$0xff]
  %v101 = vld [vmem:[%s1 + $0x1f0] sm:$0xff]
  %v102 = vld [vmem:[%s1 + $0x1f8] sm:$0xff]
  %v103 = vld [vmem:[%s1 + $0x200] sm:$0xff]
  %v104 = vld [vmem:[%s1 + $0x208] sm:$0xff]
  %v105 = vld [vmem:[%s1 + $0x210] sm:$0xff]
  %v106 = vld [vmem:[%s1 + $0x218] sm:$0xff]
  %v107 = vld [vmem:[%s1 + $0x220] sm:$0xff]
  %v108 = vld [vmem:[%s1 + $0x228] sm:$0xff]
  %v109 = vld [vmem:[%s1 + $0x230] sm:$0xff]
  %v110 = vld [vmem:[%s1 + $0x238] sm:$0xff]
  %v111 = vld [vmem:[%s1 + $0x240] sm:$0xff]
  %v112 = vld [vmem:[%s1 + $0x248] sm:$0xff]
  %v113 = vld [vmem:[%s1 + $0x250] sm:$0xff]
  %v114 = vld [vmem:[%s1 + $0x258] sm:$0xff]
  %v115 = vld [vmem:[%s1 + $0x260] sm:$0xff]
  %v116 = vld [vmem:[%s1 + $0x268] sm:$0xff]
  %v117 = vld [vmem:[%s1 + $0x270] sm:$0xff]
  %v118 = vld [vmem:[%s1 + $0x278] sm:$0xff]
  %v119 = vld [vmem:[%s1 + $0x280] sm:$0xff]
  %v120 = vld [vmem:[%s1 + $0x288] sm:$0xff]
  %v121 = vld [vmem:[%s1 + $0x290] sm:$0xff]
  %v122 = vld [vmem:[%s1 + $0x298] sm:$0xff]
  %v123 = vld [vmem:[%s1 + $0x2a0] sm:$0xff]
  %v124 = vld [vmem:[%s1 + $0x2a8] sm:$0xff]
  %v125 = vld [vmem:[%s1 + $0x2b0] sm:$0xff]
  %v126 = vld [vmem:[%s1 + $0x2b8] sm:$0xff]
  %v127 = vld [vmem:[%s1 + $0x2c0] sm:$0xff]
  %v128 = vld [vmem:[%s1 + $0x2c8] sm:$0xff]
  %v129 = vld [vmem:[%s1 + $0x2d0] sm:$0xff]
  %v130 = vld [vmem:[%s1 + $0x2d8] sm:$0xff]
  %v131 = vld [vmem:[%s1 + $0x2e0] sm:$0xff]
  %v132 = vld [vmem:[%s1 + $0x2e8] sm:$0xff]
  %v133 = vld [vmem:[%s1 + $0x2f0] sm:$0xff]
  %v134 = vld [vmem:[%s1 + $0x2f8] sm:$0xff]
  %v135 = vld [vmem:[%s2] sm:$0x3]
  %v137 = vlaneseq
  %v138 = vshrl.u32 %v137, 7
  %v139 = vsub.s32 0, %v138
  %v140 = vrot.slane %v135, %v139
  %v141 = vlaneseq
  %v142 = vshrl.u32 %v141, 7
  %v143 = vsub.s32 1, %v142
  %v144 = vrot.slane %v135, %v143
  %v159 = vunpack.c.l.b16 %v27
  %v160 = vunpack.c.h.b16 %v27
  %v161 = vunpack.c.l.b16 %v28
  %v162 = vunpack.c.h.b16 %v28
  %v163 = vunpack.c.l.b16 %v29
  %v164 = vunpack.c.h.b16 %v29
  %v165 = vunpack.c.l.b16 %v30
  %v166 = vunpack.c.h.b16 %v30
  %v167 = vunpack.c.l.b16 %v31
  %v168 = vunpack.c.h.b16 %v31
  %v169 = vunpack.c.l.b16 %v32
  %v170 = vunpack.c.h.b16 %v32
  %v171 = vunpack.c.l.b16 %v33
  %v172 = vunpack.c.h.b16 %v33
  %v173 = vunpack.c.l.b16 %v34
  %v174 = vunpack.c.h.b16 %v34
  %v175 = vunpack.c.l.b16 %v35
  %v176 = vunpack.c.h.b16 %v35
  %v177 = vunpack.c.l.b16 %v36
  %v178 = vunpack.c.h.b16 %v36
  %v179 = vunpack.c.l.b16 %v37
  %v180 = vunpack.c.h.b16 %v37
  %v181 = vunpack.c.l.b16 %v38
  %v182 = vunpack.c.h.b16 %v38
  %v183 = vpack.c.b16 %v165, %v159
  %v184 = vpack.c.b16 %v166, %v160
  %v185 = vpack.c.b16 %v167, %v161
  %v186 = vpack.c.b16 %v168, %v162
  %v187 = vpack.c.b16 %v169, %v163
  %v188 = vpack.c.b16 %v170, %v164
  %v189 = vpack.c.b16 %v177, %v171
  %v190 = vpack.c.b16 %v178, %v172
  %v191 = vpack.c.b16 %v179, %v173
  %v192 = vpack.c.b16 %v180, %v174
  %v193 = vpack.c.b16 %v181, %v175
  %v194 = vpack.c.b16 %v182, %v176
  %v303 = vunpack.c.l.b16 %v39
  %v304 = vunpack.c.h.b16 %v39
  %v305 = vunpack.c.l.b16 %v40
  %v306 = vunpack.c.h.b16 %v40
  %v307 = vunpack.c.l.b16 %v41
  %v308 = vunpack.c.h.b16 %v41
  %v309 = vunpack.c.l.b16 %v42
  %v310 = vunpack.c.h.b16 %v42
  %v311 = vunpack.c.l.b16 %v43
  %v312 = vunpack.c.h.b16 %v43
  %v313 = vunpack.c.l.b16 %v44
  %v314 = vunpack.c.h.b16 %v44
  %v315 = vunpack.c.l.b16 %v45
  %v316 = vunpack.c.h.b16 %v45
  %v317 = vunpack.c.l.b16 %v46
  %v318 = vunpack.c.h.b16 %v46
  %v319 = vunpack.c.l.b16 %v47
  %v320 = vunpack.c.h.b16 %v47
  %v321 = vunpack.c.l.b16 %v48
  %v322 = vunpack.c.h.b16 %v48
  %v323 = vunpack.c.l.b16 %v49
  %v324 = vunpack.c.h.b16 %v49
  %v325 = vunpack.c.l.b16 %v50
  %v326 = vunpack.c.h.b16 %v50
  %v327 = vunpack.c.l.b16 %v51
  %v328 = vunpack.c.h.b16 %v51
  %v329 = vunpack.c.l.b16 %v52
  %v330 = vunpack.c.h.b16 %v52
  %v331 = vunpack.c.l.b16 %v53
  %v332 = vunpack.c.h.b16 %v53
  %v333 = vunpack.c.l.b16 %v54
  %v334 = vunpack.c.h.b16 %v54
  %v335 = vunpack.c.l.b16 %v55
  %v336 = vunpack.c.h.b16 %v55
  %v337 = vunpack.c.l.b16 %v56
  %v338 = vunpack.c.h.b16 %v56
  %v339 = vunpack.c.l.b16 %v57
  %v340 = vunpack.c.h.b16 %v57
  %v341 = vunpack.c.l.b16 %v58
  %v342 = vunpack.c.h.b16 %v58
  %v343 = vunpack.c.l.b16 %v59
  %v344 = vunpack.c.h.b16 %v59
  %v345 = vunpack.c.l.b16 %v60
  %v346 = vunpack.c.h.b16 %v60
  %v347 = vunpack.c.l.b16 %v61
  %v348 = vunpack.c.h.b16 %v61
  %v349 = vunpack.c.l.b16 %v62
  %v350 = vunpack.c.h.b16 %v62
  %v351 = vunpack.c.l.b16 %v63
  %v352 = vunpack.c.h.b16 %v63
  %v353 = vunpack.c.l.b16 %v64
  %v354 = vunpack.c.h.b16 %v64
  %v355 = vunpack.c.l.b16 %v65
  %v356 = vunpack.c.h.b16 %v65
  %v357 = vunpack.c.l.b16 %v66
  %v358 = vunpack.c.h.b16 %v66
  %v359 = vunpack.c.l.b16 %v67
  %v360 = vunpack.c.h.b16 %v67
  %v361 = vunpack.c.l.b16 %v68
  %v362 = vunpack.c.h.b16 %v68
  %v363 = vunpack.c.l.b16 %v69
  %v364 = vunpack.c.h.b16 %v69
  %v365 = vunpack.c.l.b16 %v70
  %v366 = vunpack.c.h.b16 %v70
  %v367 = vunpack.c.l.b16 %v71
  %v368 = vunpack.c.h.b16 %v71
  %v369 = vunpack.c.l.b16 %v72
  %v370 = vunpack.c.h.b16 %v72
  %v371 = vunpack.c.l.b16 %v73
  %v372 = vunpack.c.h.b16 %v73
  %v373 = vunpack.c.l.b16 %v74
  %v374 = vunpack.c.h.b16 %v74
  %v375 = vunpack.c.l.b16 %v75
  %v376 = vunpack.c.h.b16 %v75
  %v377 = vunpack.c.l.b16 %v76
  %v378 = vunpack.c.h.b16 %v76
  %v379 = vunpack.c.l.b16 %v77
  %v380 = vunpack.c.h.b16 %v77
  %v381 = vunpack.c.l.b16 %v78
  %v382 = vunpack.c.h.b16 %v78
  %v383 = vunpack.c.l.b16 %v79
  %v384 = vunpack.c.h.b16 %v79
  %v385 = vunpack.c.l.b16 %v80
  %v386 = vunpack.c.h.b16 %v80
  %v387 = vunpack.c.l.b16 %v81
  %v388 = vunpack.c.h.b16 %v81
  %v389 = vunpack.c.l.b16 %v82
  %v390 = vunpack.c.h.b16 %v82
  %v391 = vunpack.c.l.b16 %v83
  %v392 = vunpack.c.h.b16 %v83
  %v393 = vunpack.c.l.b16 %v84
  %v394 = vunpack.c.h.b16 %v84
  %v395 = vunpack.c.l.b16 %v85
  %v396 = vunpack.c.h.b16 %v85
  %v397 = vunpack.c.l.b16 %v86
  %v398 = vunpack.c.h.b16 %v86
  %v399 = vunpack.c.l.b16 %v87
  %v400 = vunpack.c.h.b16 %v87
  %v401 = vunpack.c.l.b16 %v88
  %v402 = vunpack.c.h.b16 %v88
  %v403 = vunpack.c.l.b16 %v89
  %v404 = vunpack.c.h.b16 %v89
  %v405 = vunpack.c.l.b16 %v90
  %v406 = vunpack.c.h.b16 %v90
  %v407 = vunpack.c.l.b16 %v91
  %v408 = vunpack.c.h.b16 %v91
  %v409 = vunpack.c.l.b16 %v92
  %v410 = vunpack.c.h.b16 %v92
  %v411 = vunpack.c.l.b16 %v93
  %v412 = vunpack.c.h.b16 %v93
  %v413 = vunpack.c.l.b16 %v94
  %v414 = vunpack.c.h.b16 %v94
  %v415 = vunpack.c.l.b16 %v95
  %v416 = vunpack.c.h.b16 %v95
  %v417 = vunpack.c.l.b16 %v96
  %v418 = vunpack.c.h.b16 %v96
  %v419 = vunpack.c.l.b16 %v97
  %v420 = vunpack.c.h.b16 %v97
  %v421 = vunpack.c.l.b16 %v98
  %v422 = vunpack.c.h.b16 %v98
  %v423 = vunpack.c.l.b16 %v99
  %v424 = vunpack.c.h.b16 %v99
  %v425 = vunpack.c.l.b16 %v100
  %v426 = vunpack.c.h.b16 %v100
  %v427 = vunpack.c.l.b16 %v101
  %v428 = vunpack.c.h.b16 %v101
  %v429 = vunpack.c.l.b16 %v102
  %v430 = vunpack.c.h.b16 %v102
  %v431 = vunpack.c.l.b16 %v103
  %v432 = vunpack.c.h.b16 %v103
  %v433 = vunpack.c.l.b16 %v104
  %v434 = vunpack.c.h.b16 %v104
  %v435 = vunpack.c.l.b16 %v105
  %v436 = vunpack.c.h.b16 %v105
  %v437 = vunpack.c.l.b16 %v106
  %v438 = vunpack.c.h.b16 %v106
  %v439 = vunpack.c.l.b16 %v107
  %v440 = vunpack.c.h.b16 %v107
  %v441 = vunpack.c.l.b16 %v108
  %v442 = vunpack.c.h.b16 %v108
  %v443 = vunpack.c.l.b16 %v109
  %v444 = vunpack.c.h.b16 %v109
  %v445 = vunpack.c.l.b16 %v110
  %v446 = vunpack.c.h.b16 %v110
  %v447 = vunpack.c.l.b16 %v111
  %v448 = vunpack.c.h.b16 %v111
  %v449 = vunpack.c.l.b16 %v112
  %v450 = vunpack.c.h.b16 %v112
  %v451 = vunpack.c.l.b16 %v113
  %v452 = vunpack.c.h.b16 %v113
  %v453 = vunpack.c.l.b16 %v114
  %v454 = vunpack.c.h.b16 %v114
  %v455 = vunpack.c.l.b16 %v115
  %v456 = vunpack.c.h.b16 %v115
  %v457 = vunpack.c.l.b16 %v116
  %v458 = vunpack.c.h.b16 %v116
  %v459 = vunpack.c.l.b16 %v117
  %v460 = vunpack.c.h.b16 %v117
  %v461 = vunpack.c.l.b16 %v118
  %v462 = vunpack.c.h.b16 %v118
  %v463 = vunpack.c.l.b16 %v119
  %v464 = vunpack.c.h.b16 %v119
  %v465 = vunpack.c.l.b16 %v120
  %v466 = vunpack.c.h.b16 %v120
  %v467 = vunpack.c.l.b16 %v121
  %v468 = vunpack.c.h.b16 %v121
  %v469 = vunpack.c.l.b16 %v122
  %v470 = vunpack.c.h.b16 %v122
  %v471 = vunpack.c.l.b16 %v123
  %v472 = vunpack.c.h.b16 %v123
  %v473 = vunpack.c.l.b16 %v124
  %v474 = vunpack.c.h.b16 %v124
  %v475 = vunpack.c.l.b16 %v125
  %v476 = vunpack.c.h.b16 %v125
  %v477 = vunpack.c.l.b16 %v126
  %v478 = vunpack.c.h.b16 %v126
  %v479 = vunpack.c.l.b16 %v127
  %v480 = vunpack.c.h.b16 %v127
  %v481 = vunpack.c.l.b16 %v128
  %v482 = vunpack.c.h.b16 %v128
  %v483 = vunpack.c.l.b16 %v129
  %v484 = vunpack.c.h.b16 %v129
  %v485 = vunpack.c.l.b16 %v130
  %v486 = vunpack.c.h.b16 %v130
  %v487 = vunpack.c.l.b16 %v131
  %v488 = vunpack.c.h.b16 %v131
  %v489 = vunpack.c.l.b16 %v132
  %v490 = vunpack.c.h.b16 %v132
  %v491 = vunpack.c.l.b16 %v133
  %v492 = vunpack.c.h.b16 %v133
  %v493 = vunpack.c.l.b16 %v134
  %v494 = vunpack.c.h.b16 %v134
  %v495 = vpack.c.b16 %v305, %v303
  %v496 = vpack.c.b16 %v306, %v304
  %v497 = vpack.c.b16 %v309, %v307
  %v498 = vpack.c.b16 %v310, %v308
  %v499 = vpack.c.b16 %v313, %v311
  %v500 = vpack.c.b16 %v314, %v312
  %v501 = vpack.c.b16 %v317, %v315
  %v502 = vpack.c.b16 %v318, %v316
  %v503 = vpack.c.b16 %v321, %v319
  %v504 = vpack.c.b16 %v322, %v320
  %v505 = vpack.c.b16 %v325, %v323
  %v506 = vpack.c.b16 %v326, %v324
  %v507 = vpack.c.b16 %v329, %v327
  %v508 = vpack.c.b16 %v330, %v328
  %v509 = vpack.c.b16 %v333, %v331
  %v510 = vpack.c.b16 %v334, %v332
  %v511 = vpack.c.b16 %v337, %v335
  %v512 = vpack.c.b16 %v338, %v336
  %v513 = vpack.c.b16 %v341, %v339
  %v514 = vpack.c.b16 %v342, %v340
  %v515 = vpack.c.b16 %v345, %v343
  %v516 = vpack.c.b16 %v346, %v344
  %v517 = vpack.c.b16 %v349, %v347
  %v518 = vpack.c.b16 %v350, %v348
  %v519 = vpack.c.b16 %v353, %v351
  %v520 = vpack.c.b16 %v354, %v352
  %v521 = vpack.c.b16 %v357, %v355
  %v522 = vpack.c.b16 %v358, %v356
  %v523 = vpack.c.b16 %v361, %v359
  %v524 = vpack.c.b16 %v362, %v360
  %v525 = vpack.c.b16 %v365, %v363
  %v526 = vpack.c.b16 %v366, %v364
  %v527 = vpack.c.b16 %v369, %v367
  %v528 = vpack.c.b16 %v370, %v368
  %v529 = vpack.c.b16 %v373, %v371
  %v530 = vpack.c.b16 %v374, %v372
  %v531 = vpack.c.b16 %v377, %v375
  %v532 = vpack.c.b16 %v378, %v376
  %v533 = vpack.c.b16 %v381, %v379
  %v534 = vpack.c.b16 %v382, %v380
  %v535 = vpack.c.b16 %v385, %v383
  %v536 = vpack.c.b16 %v386, %v384
  %v537 = vpack.c.b16 %v389, %v387
  %v538 = vpack.c.b16 %v390, %v388
  %v539 = vpack.c.b16 %v393, %v391
  %v540 = vpack.c.b16 %v394, %v392
  %v541 = vpack.c.b16 %v397, %v395
  %v542 = vpack.c.b16 %v398, %v396
  %v543 = vpack.c.b16 %v401, %v399
  %v544 = vpack.c.b16 %v402, %v400
  %v545 = vpack.c.b16 %v405, %v403
  %v546 = vpack.c.b16 %v406, %v404
  %v547 = vpack.c.b16 %v409, %v407
  %v548 = vpack.c.b16 %v410, %v408
  %v549 = vpack.c.b16 %v413, %v411
  %v550 = vpack.c.b16 %v414, %v412
  %v551 = vpack.c.b16 %v417, %v415
  %v552 = vpack.c.b16 %v418, %v416
  %v553 = vpack.c.b16 %v421, %v419
  %v554 = vpack.c.b16 %v422, %v420
  %v555 = vpack.c.b16 %v425, %v423
  %v556 = vpack.c.b16 %v426, %v424
  %v557 = vpack.c.b16 %v429, %v427
  %v558 = vpack.c.b16 %v430, %v428
  %v559 = vpack.c.b16 %v433, %v431
  %v560 = vpack.c.b16 %v434, %v432
  %v561 = vpack.c.b16 %v437, %v435
  %v562 = vpack.c.b16 %v438, %v436
  %v563 = vpack.c.b16 %v441, %v439
  %v564 = vpack.c.b16 %v442, %v440
  %v565 = vpack.c.b16 %v445, %v443
  %v566 = vpack.c.b16 %v446, %v444
  %v567 = vpack.c.b16 %v449, %v447
  %v568 = vpack.c.b16 %v450, %v448
  %v569 = vpack.c.b16 %v453, %v451
  %v570 = vpack.c.b16 %v454, %v452
  %v571 = vpack.c.b16 %v457, %v455
  %v572 = vpack.c.b16 %v458, %v456
  %v573 = vpack.c.b16 %v461, %v459
  %v574 = vpack.c.b16 %v462, %v460
  %v575 = vpack.c.b16 %v465, %v463
  %v576 = vpack.c.b16 %v466, %v464
  %v577 = vpack.c.b16 %v469, %v467
  %v578 = vpack.c.b16 %v470, %v468
  %v579 = vpack.c.b16 %v473, %v471
  %v580 = vpack.c.b16 %v474, %v472
  %v581 = vpack.c.b16 %v477, %v475
  %v582 = vpack.c.b16 %v478, %v476
  %v583 = vpack.c.b16 %v481, %v479
  %v584 = vpack.c.b16 %v482, %v480
  %v585 = vpack.c.b16 %v485, %v483
  %v586 = vpack.c.b16 %v486, %v484
  %v587 = vpack.c.b16 %v489, %v487
  %v588 = vpack.c.b16 %v490, %v488
  %v589 = vpack.c.b16 %v493, %v491
  %v590 = vpack.c.b16 %v494, %v492
  %687 = vmatprep.subr.bf16.mxu0 %v496
  %688 = vmatpush1.bf16.msra.mxu0 %v495
  %689 = vmatprep.subr.bf16.mxu0 %v498
  %690 = vmatpush1.bf16.msra.mxu0 %v497
  %691 = vmatprep.subr.bf16.mxu0 %v500
  %692 = vmatpush1.bf16.msra.mxu0 %v499
  %693 = vmatprep.subr.bf16.mxu0 %v502
  %694 = vmatpush1.bf16.msra.mxu0 %v501
  %695 = vmatprep.subr.bf16.mxu0 %v504
  %696 = vmatpush1.bf16.msra.mxu0 %v503
  %697 = vmatprep.subr.bf16.mxu0 %v506
  %698 = vmatpush1.bf16.msra.mxu0 %v505
  %699 = vmatprep.subr.bf16.mxu0 %v508
  %700 = vmatpush1.bf16.msra.mxu0 %v507
  %701 = vmatprep.subr.bf16.mxu0 %v510
  %702 = vmatpush1.bf16.msra.mxu0 %v509
  %703 = vmatprep.subr.bf16.mxu0 %v512
  %704 = vmatpush1.bf16.msra.mxu0 %v511
  %705 = vmatprep.subr.bf16.mxu0 %v514
  %706 = vmatpush1.bf16.msra.mxu0 %v513
  %707 = vmatprep.subr.bf16.mxu0 %v516
  %708 = vmatpush1.bf16.msra.mxu0 %v515
  %709 = vmatprep.subr.bf16.mxu0 %v518
  %710 = vmatpush1.bf16.msra.mxu0 %v517
  %711 = vmatprep.subr.bf16.mxu0 %v520
  %712 = vmatpush1.bf16.msra.mxu0 %v519
  %713 = vmatprep.subr.bf16.mxu0 %v522
  %714 = vmatpush1.bf16.msra.mxu0 %v521
  %715 = vmatprep.subr.bf16.mxu0 %v524
  %716 = vmatpush1.bf16.msra.mxu0 %v523
  %717 = vmatprep.subr.bf16.mxu0 %v526
  %718 = vmatpush1.bf16.msra.mxu0 %v525
  %719 = vmatprep.mubr.bf16.mxu0 %v184
  %720 = vmatmul.mubr.bf16.gmra.mrb[0].mxu0 %v183
  %v721 = vpop.f32.mrb[0].mxu0
  %v722 = vadd.f32 %v140, %v721
  %v723 = vpop.f32.mrb[0].mxu0
  %v724 = vadd.f32 %v144, %v723
  %v725 = vpop.f32.mrb[0].mxu0
  %v726 = vadd.f32 %v140, %v725
  %v727 = vpop.f32.mrb[0].mxu0
  %v728 = vadd.f32 %v144, %v727
  %729 = vmatprep.mubr.bf16.mxu0 %v190
  %730 = vmatmul.mubr.bf16.gmra.mrb[0].mxu0 %v189
  %v731 = vpop.f32.mrb[0].mxu0
  %v732 = vadd.f32 %v140, %v731
  %v733 = vpop.f32.mrb[0].mxu0
  %v734 = vadd.f32 %v144, %v733
  %v735 = vpop.f32.mrb[0].mxu0
  %v736 = vadd.f32 %v140, %v735
  %v737 = vpop.f32.mrb[0].mxu0
  %v738 = vadd.f32 %v144, %v737
  %739 = vdwg.mxu0
  %740 = vmatprep.subr.bf16.mxu0 %v528
  %741 = vmatpush1.bf16.msra.mxu0 %v527
  %742 = vmatprep.subr.bf16.mxu0 %v530
  %743 = vmatpush1.bf16.msra.mxu0 %v529
  %744 = vmatprep.subr.bf16.mxu0 %v532
  %745 = vmatpush1.bf16.msra.mxu0 %v531
  %746 = vmatprep.subr.bf16.mxu0 %v534
  %747 = vmatpush1.bf16.msra.mxu0 %v533
  %748 = vmatprep.subr.bf16.mxu0 %v536
  %749 = vmatpush1.bf16.msra.mxu0 %v535
  %750 = vmatprep.subr.bf16.mxu0 %v538
  %751 = vmatpush1.bf16.msra.mxu0 %v537
  %752 = vmatprep.subr.bf16.mxu0 %v540
  %753 = vmatpush1.bf16.msra.mxu0 %v539
  %754 = vmatprep.subr.bf16.mxu0 %v542
  %755 = vmatpush1.bf16.msra.mxu0 %v541
  %756 = vmatprep.subr.bf16.mxu0 %v544
  %757 = vmatpush1.bf16.msra.mxu0 %v543
  %758 = vmatprep.subr.bf16.mxu0 %v546
  %759 = vmatpush1.bf16.msra.mxu0 %v545
  %760 = vmatprep.subr.bf16.mxu0 %v548
  %761 = vmatpush1.bf16.msra.mxu0 %v547
  %762 = vmatprep.subr.bf16.mxu0 %v550
  %763 = vmatpush1.bf16.msra.mxu0 %v549
  %764 = vmatprep.subr.bf16.mxu0 %v552
  %765 = vmatpush1.bf16.msra.mxu0 %v551
  %766 = vmatprep.subr.bf16.mxu0 %v554
  %767 = vmatpush1.bf16.msra.mxu0 %v553
  %768 = vmatprep.subr.bf16.mxu0 %v556
  %769 = vmatpush1.bf16.msra.mxu0 %v555
  %770 = vmatprep.subr.bf16.mxu0 %v558
  %771 = vmatpush1.bf16.msra.mxu0 %v557
  %772 = vmatprep.mubr.bf16.mxu0 %v186
  %773 = vmatmul.mubr.bf16.gmra.mrb[0].mxu0 %v185
  %v774 = vpop.f32.mrb[0].mxu0
  %v775 = vadd.f32 %v722, %v774
  %v776 = vpop.f32.mrb[0].mxu0
  %v777 = vadd.f32 %v724, %v776
  %v778 = vpop.f32.mrb[0].mxu0
  %v779 = vadd.f32 %v726, %v778
  %v780 = vpop.f32.mrb[0].mxu0
  %v781 = vadd.f32 %v728, %v780
  %782 = vmatprep.mubr.bf16.mxu0 %v192
  %783 = vmatmul.mubr.bf16.gmra.mrb[0].mxu0 %v191
  %v784 = vpop.f32.mrb[0].mxu0
  %v785 = vadd.f32 %v732, %v784
  %v786 = vpop.f32.mrb[0].mxu0
  %v787 = vadd.f32 %v734, %v786
  %v788 = vpop.f32.mrb[0].mxu0
  %v789 = vadd.f32 %v736, %v788
  %v790 = vpop.f32.mrb[0].mxu0
  %v791 = vadd.f32 %v738, %v790
  %792 = vdwg.mxu0
  %793 = vmatprep.subr.bf16.mxu0 %v560
  %794 = vmatpush1.bf16.msra.mxu0 %v559
  %795 = vmatprep.subr.bf16.mxu0 %v562
  %796 = vmatpush1.bf16.msra.mxu0 %v561
  %797 = vmatprep.subr.bf16.mxu0 %v564
  %798 = vmatpush1.bf16.msra.mxu0 %v563
  %799 = vmatprep.subr.bf16.mxu0 %v566
  %800 = vmatpush1.bf16.msra.mxu0 %v565
  %801 = vmatprep.subr.bf16.mxu0 %v568
  %802 = vmatpush1.bf16.msra.mxu0 %v567
  %803 = vmatprep.subr.bf16.mxu0 %v570
  %804 = vmatpush1.bf16.msra.mxu0 %v569
  %805 = vmatprep.subr.bf16.mxu0 %v572
  %806 = vmatpush1.bf16.msra.mxu0 %v571
  %807 = vmatprep.subr.bf16.mxu0 %v574
  %808 = vmatpush1.bf16.msra.mxu0 %v573
  %809 = vmatprep.subr.bf16.mxu0 %v576
  %810 = vmatpush1.bf16.msra.mxu0 %v575
  %811 = vmatprep.subr.bf16.mxu0 %v578
  %812 = vmatpush1.bf16.msra.mxu0 %v577
  %813 = vmatprep.subr.bf16.mxu0 %v580
  %814 = vmatpush1.bf16.msra.mxu0 %v579
  %815 = vmatprep.subr.bf16.mxu0 %v582
  %816 = vmatpush1.bf16.msra.mxu0 %v581
  %817 = vmatprep.subr.bf16.mxu0 %v584
  %818 = vmatpush1.bf16.msra.mxu0 %v583
  %819 = vmatprep.subr.bf16.mxu0 %v586
  %820 = vmatpush1.bf16.msra.mxu0 %v585
  %821 = vmatprep.subr.bf16.mxu0 %v588
  %822 = vmatpush1.bf16.msra.mxu0 %v587
  %823 = vmatprep.subr.bf16.mxu0 %v590
  %824 = vmatpush1.bf16.msra.mxu0 %v589
  %825 = vmatprep.mubr.bf16.mxu0 %v188
  %826 = vmatmul.mubr.bf16.gmra.mrb[0].mxu0 %v187
  %v827 = vpop.f32.mrb[0].mxu0
  %v828 = vadd.f32 %v775, %v827
  %v829 = vpop.f32.mrb[0].mxu0
  %v830 = vadd.f32 %v777, %v829
  %v831 = vpop.f32.mrb[0].mxu0
  %v832 = vadd.f32 %v779, %v831
  %v833 = vpop.f32.mrb[0].mxu0
  %v834 = vadd.f32 %v781, %v833
  %835 = vmatprep.mubr.bf16.mxu0 %v194
  %836 = vmatmul.mubr.bf16.gmra.mrb[0].mxu0 %v193
  %v837 = vpop.f32.mrb[0].mxu0
  %v838 = vadd.f32 %v785, %v837
  %v839 = vpop.f32.mrb[0].mxu0
  %v840 = vadd.f32 %v787, %v839
  %v841 = vpop.f32.mrb[0].mxu0
  %v842 = vadd.f32 %v789, %v841
  %v843 = vpop.f32.mrb[0].mxu0
  %v844 = vadd.f32 %v791, %v843
  %845 = vdwg.mxu0
  %vm846 = vcmp.gt.f32.partialorder %v828, 0.0
  %vm847 = vcmp.gt.f32.partialorder %v830, 0.0
  %vm848 = vcmp.gt.f32.partialorder %v832, 0.0
  %vm849 = vcmp.gt.f32.partialorder %v834, 0.0
  %vm850 = vcmp.gt.f32.partialorder %v838, 0.0
  %vm851 = vcmp.gt.f32.partialorder %v840, 0.0
  %vm852 = vcmp.gt.f32.partialorder %v842, 0.0
  %vm853 = vcmp.gt.f32.partialorder %v844, 0.0
  %v854 = vmul.f32 %v828, 0.2
  %v855 = vmul.f32 %v830, 0.2
  %v856 = vmul.f32 %v832, 0.2
  %v857 = vmul.f32 %v834, 0.2
  %v858 = vmul.f32 %v838, 0.2
  %v859 = vmul.f32 %v840, 0.2
  %v860 = vmul.f32 %v842, 0.2
  %v861 = vmul.f32 %v844, 0.2
  %v862 = vsel %vm846, %v828, %v854
  %v863 = vsel %vm847, %v830, %v855
  %v864 = vsel %vm848, %v832, %v856
  %v865 = vsel %vm849, %v834, %v857
  %v866 = vsel %vm850, %v838, %v858
  %v867 = vsel %vm851, %v840, %v859
  %v868 = vsel %vm852, %v842, %v860
  %v869 = vsel %vm853, %v844, %v861
  %v870 = vpack.c.bf16 %v864, %v862
  %v871 = vpack.c.bf16 %v865, %v863
  %v872 = vpack.c.bf16 %v868, %v866
  %v873 = vpack.c.bf16 %v869, %v867
  %v874 = vld [vmem:[%s3] sm:$0xf]
  %v875 = vld [vmem:[%s3 + $0x4] sm:$0xf]
  %v876 = vld [vmem:[%s3 + $0x8] sm:$0xf]
  %v877 = vld [vmem:[%s3 + $0xc] sm:$0xf]
  %v878 = vld [vmem:[%s3 + $0x10] sm:$0xf]
  %v879 = vld [vmem:[%s3 + $0x14] sm:$0xf]
  %v880 = vld [vmem:[%s3 + $0x18] sm:$0xf]
  %v881 = vld [vmem:[%s3 + $0x1c] sm:$0xf]
  %v882 = vld [vmem:[%s3 + $0x20] sm:$0xf]
  %v883 = vld [vmem:[%s3 + $0x24] sm:$0xf]
  %v884 = vld [vmem:[%s3 + $0x28] sm:$0xf]
  %v885 = vld [vmem:[%s3 + $0x2c] sm:$0xf]
  %v886 = vld [vmem:[%s3 + $0x30] sm:$0xf]
  %v887 = vld [vmem:[%s3 + $0x34] sm:$0xf]
  %v888 = vld [vmem:[%s3 + $0x38] sm:$0xf]
  %v889 = vld [vmem:[%s3 + $0x3c] sm:$0xf]
  %v890 = vld [vmem:[%s3 + $0x40] sm:$0xf]
  %v891 = vld [vmem:[%s3 + $0x44] sm:$0xf]
  %v892 = vld [vmem:[%s3 + $0x48] sm:$0xf]
  %v893 = vld [vmem:[%s3 + $0x4c] sm:$0xf]
  %v894 = vld [vmem:[%s3 + $0x50] sm:$0xf]
  %v895 = vld [vmem:[%s3 + $0x54] sm:$0xf]
  %v896 = vld [vmem:[%s3 + $0x58] sm:$0xf]
  %v897 = vld [vmem:[%s3 + $0x5c] sm:$0xf]
  %v898 = vld [vmem:[%s3 + $0x60] sm:$0xf]
  %v899 = vld [vmem:[%s3 + $0x64] sm:$0xf]
  %v900 = vld [vmem:[%s3 + $0x68] sm:$0xf]
  %v901 = vld [vmem:[%s3 + $0x6c] sm:$0xf]
  %v902 = vld [vmem:[%s3 + $0x70] sm:$0xf]
  %v903 = vld [vmem:[%s3 + $0x74] sm:$0xf]
  %v904 = vld [vmem:[%s3 + $0x78] sm:$0xf]
  %v905 = vld [vmem:[%s3 + $0x7c] sm:$0xf]
  %v906 = vld [vmem:[%s4] sm:$0xff]
  %v907 = vld [vmem:[%s4 + $0x8] sm:$0xff]
  %v908 = vld [vmem:[%s4 + $0x10] sm:$0xff]
  %v909 = vld [vmem:[%s4 + $0x18] sm:$0xff]
  %v942 = vunpack.c.l.b16 %v874
  %v943 = vunpack.c.l.b16 %v875
  %v944 = vunpack.c.l.b16 %v876
  %v945 = vunpack.c.l.b16 %v877
  %v946 = vunpack.c.l.b16 %v878
  %v947 = vunpack.c.l.b16 %v879
  %v948 = vunpack.c.l.b16 %v880
  %v949 = vunpack.c.l.b16 %v881
  %v950 = vunpack.c.l.b16 %v882
  %v951 = vunpack.c.l.b16 %v883
  %v952 = vunpack.c.l.b16 %v884
  %v953 = vunpack.c.l.b16 %v885
  %v954 = vunpack.c.l.b16 %v886
  %v955 = vunpack.c.l.b16 %v887
  %v956 = vunpack.c.l.b16 %v888
  %v957 = vunpack.c.l.b16 %v889
  %v958 = vunpack.c.l.b16 %v890
  %v959 = vunpack.c.l.b16 %v891
  %v960 = vunpack.c.l.b16 %v892
  %v961 = vunpack.c.l.b16 %v893
  %v962 = vunpack.c.l.b16 %v894
  %v963 = vunpack.c.l.b16 %v895
  %v964 = vunpack.c.l.b16 %v896
  %v965 = vunpack.c.l.b16 %v897
  %v966 = vunpack.c.l.b16 %v898
  %v967 = vunpack.c.l.b16 %v899
  %v968 = vunpack.c.l.b16 %v900
  %v969 = vunpack.c.l.b16 %v901
  %v970 = vunpack.c.l.b16 %v902
  %v971 = vunpack.c.l.b16 %v903
  %v972 = vunpack.c.l.b16 %v904
  %v973 = vunpack.c.l.b16 %v905
  %v974 = vpack.c.b16 %v943, %v942
  %v975 = vpack.c.b16 %v945, %v944
  %v976 = vpack.c.b16 %v947, %v946
  %v977 = vpack.c.b16 %v949, %v948
  %v978 = vpack.c.b16 %v951, %v950
  %v979 = vpack.c.b16 %v953, %v952
  %v980 = vpack.c.b16 %v955, %v954
  %v981 = vpack.c.b16 %v957, %v956
  %v982 = vpack.c.b16 %v959, %v958
  %v983 = vpack.c.b16 %v961, %v960
  %v984 = vpack.c.b16 %v963, %v962
  %v985 = vpack.c.b16 %v965, %v964
  %v986 = vpack.c.b16 %v967, %v966
  %v987 = vpack.c.b16 %v969, %v968
  %v988 = vpack.c.b16 %v971, %v970
  %v989 = vpack.c.b16 %v973, %v972
  %1006 = vmatprep.subr.bf16.mxu0 0
  %1007 = vmatpush1.bf16.msra.mxu0 %v974
  %1008 = vmatprep.subr.bf16.mxu0 0
  %1009 = vmatpush1.bf16.msra.mxu0 %v975
  %1010 = vmatprep.subr.bf16.mxu0 0
  %1011 = vmatpush1.bf16.msra.mxu0 %v976
  %1012 = vmatprep.subr.bf16.mxu0 0
  %1013 = vmatpush1.bf16.msra.mxu0 %v977
  %1014 = vmatprep.subr.bf16.mxu0 0
  %1015 = vmatpush1.bf16.msra.mxu0 %v978
  %1016 = vmatprep.subr.bf16.mxu0 0
  %1017 = vmatpush1.bf16.msra.mxu0 %v979
  %1018 = vmatprep.subr.bf16.mxu0 0
  %1019 = vmatpush1.bf16.msra.mxu0 %v980
  %1020 = vmatprep.subr.bf16.mxu0 0
  %1021 = vmatpush1.bf16.msra.mxu0 %v981
  %1022 = vmatprep.subr.bf16.mxu0 0
  %1023 = vmatpush1.bf16.msra.mxu0 %v982
  %1024 = vmatprep.subr.bf16.mxu0 0
  %1025 = vmatpush1.bf16.msra.mxu0 %v983
  %1026 = vmatprep.subr.bf16.mxu0 0
  %1027 = vmatpush1.bf16.msra.mxu0 %v984
  %1028 = vmatprep.subr.bf16.mxu0 0
  %1029 = vmatpush1.bf16.msra.mxu0 %v985
  %1030 = vmatprep.subr.bf16.mxu0 0
  %1031 = vmatpush1.bf16.msra.mxu0 %v986
  %1032 = vmatprep.subr.bf16.mxu0 0
  %1033 = vmatpush1.bf16.msra.mxu0 %v987
  %1034 = vmatprep.subr.bf16.mxu0 0
  %1035 = vmatpush1.bf16.msra.mxu0 %v988
  %1036 = vmatprep.subr.bf16.mxu0 0
  %1037 = vmatpush1.bf16.msra.mxu0 %v989
  %1038 = vmatprep.mubr.bf16.mxu0 %v871
  %1039 = vmatmul.mubr.bf16.gmra.mrb[0].mxu0 %v870
  %v1040 = vpop.f32.mrb[0].mxu0
  %v1041 = vadd.f32 %v906, %v1040
  %v1042 = vpop.f32.mrb[0].mxu0
  %v1043 = vpop.f32.mrb[0].mxu0
  %v1044 = vadd.f32 %v907, %v1043
  %v1045 = vpop.f32.mrb[0].mxu0
  %1046 = vmatprep.mubr.bf16.mxu0 %v873
  %1047 = vmatmul.mubr.bf16.gmra.mrb[0].mxu0 %v872
  %v1048 = vpop.f32.mrb[0].mxu0
  %v1049 = vadd.f32 %v908, %v1048
  %v1050 = vpop.f32.mrb[0].mxu0
  %v1051 = vpop.f32.mrb[0].mxu0
  %v1052 = vadd.f32 %v909, %v1051
  %v1053 = vpop.f32.mrb[0].mxu0
  %1054 = vdwg.mxu0
  %vm1055 = vcmp.gt.f32.partialorder %v1041, 0.0
  %vm1056 = vcmp.gt.f32.partialorder %v1044, 0.0
  %vm1057 = vcmp.gt.f32.partialorder %v1049, 0.0
  %vm1058 = vcmp.gt.f32.partialorder %v1052, 0.0
  %v1059 = vmul.f32 %v1041, 0.2
  %v1060 = vmul.f32 %v1044, 0.2
  %v1061 = vmul.f32 %v1049, 0.2
  %v1062 = vmul.f32 %v1052, 0.2
  %v1063 = vsel %vm1055, %v1041, %v1059
  %v1064 = vsel %vm1056, %v1044, %v1060
  %v1065 = vsel %vm1057, %v1049, %v1061
  %v1066 = vsel %vm1058, %v1052, %v1062
  %vm1067 = vcmask 261120
  %1068 = vst.msk [vmem:[#allocation2] sm:$0xff] %vm1067, %v1063
  %1069 = vst.msk [vmem:[#allocation2 + $0x8] sm:$0xff] %vm1067, %v1064
  %1070 = vst.msk [vmem:[#allocation2 + $0x10] sm:$0xff] %vm1067, %v1065
  %1071 = vst.msk [vmem:[#allocation2 + $0x18] sm:$0xff] %vm1067, %v1066
  %v1072 = vld [vmem:[#allocation2] sm:$0x3]
  %vm1073 = vcmask 254976
  %1074 = vst.msk [vmem:[#allocation3] sm:$0x3] %vm1073, %v1072
  %v1075 = vld [vmem:[#allocation2 + $0x2] sm:$0x3]
  %v1078 = vunpack.c.l.s4 1983009808
  %v1079 = vunpack.c.0.s8 %v1078
  %v1080 = vlaneseq
  %v1081 = vshrl.u32 %v1080, 7
  %v1082 = vsub.s32 %v1079, %v1081
  %v1083 = vrot.slane %v1075, %v1082
  %1084 = vrot.lane.b32.xlu0 %v1083, 32
  %v1085 = vpop.permute.xlu0 %1084
  %vm1087 = vcmask 517376
  %1088 = vst.msk [vmem:[#allocation3] sm:$0x3] %vm1087, %v1085
  %v1089 = vld [vmem:[#allocation2 + $0x4] sm:$0x3]
  %v1092 = vunpack.c.l.s4 1983009808
  %v1093 = vunpack.c.0.s8 %v1092
  %v1094 = vlaneseq
  %v1095 = vshrl.u32 %v1094, 7
  %v1096 = vsub.s32 %v1093, %v1095
  %v1097 = vrot.slane %v1089, %v1096
  %1098 = vrot.lane.b32.xlu0 %v1097, 64
  %v1099 = vpop.permute.xlu0 %1098
  %vm1101 = vcmask 779776
  %1102 = vst.msk [vmem:[#allocation3] sm:$0x3] %vm1101, %v1099
  %v1103 = vld [vmem:[#allocation2 + $0x6] sm:$0x3]
  %v1106 = vunpack.c.l.s4 1983009808
  %v1107 = vunpack.c.0.s8 %v1106
  %v1108 = vlaneseq
  %v1109 = vshrl.u32 %v1108, 7
  %v1110 = vsub.s32 %v1107, %v1109
  %v1111 = vrot.slane %v1103, %v1110
  %1112 = vrot.lane.b32.xlu0 %v1111, 96
  %v1113 = vpop.permute.xlu0 %1112
  %vm1115 = vcmask 1042176
  %1116 = vst.msk [vmem:[#allocation3] sm:$0x3] %vm1115, %v1113
  %v1117 = vld [vmem:[#allocation2 + $0x8] sm:$0x3]
  %1118 = vst.msk [vmem:[#allocation3 + $0x2] sm:$0x3] %vm1073, %v1117
  %v1119 = vld [vmem:[#allocation2 + $0xa] sm:$0x3]
  %v1122 = vunpack.c.l.s4 1983009808
  %v1123 = vunpack.c.0.s8 %v1122
  %v1124 = vlaneseq
  %v1125 = vshrl.u32 %v1124, 7
  %v1126 = vsub.s32 %v1123, %v1125
  %v1127 = vrot.slane %v1119, %v1126
  %1128 = vrot.lane.b32.xlu0 %v1127, 32
  %v1129 = vpop.permute.xlu0 %1128
  %1131 = vst.msk [vmem:[#allocation3 + $0x2] sm:$0x3] %vm1087, %v1129
  %v1132 = vld [vmem:[#allocation2 + $0xc] sm:$0x3]
  %v1135 = vunpack.c.l.s4 1983009808
  %v1136 = vunpack.c.0.s8 %v1135
  %v1137 = vlaneseq
  %v1138 = vshrl.u32 %v1137, 7
  %v1139 = vsub.s32 %v1136, %v1138
  %v1140 = vrot.slane %v1132, %v1139
  %1141 = vrot.lane.b32.xlu0 %v1140, 64
  %v1142 = vpop.permute.xlu0 %1141
  %1144 = vst.msk [vmem:[#allocation3 + $0x2] sm:$0x3] %vm1101, %v1142
  %v1145 = vld [vmem:[#allocation2 + $0xe] sm:$0x3]
  %v1148 = vunpack.c.l.s4 1983009808
  %v1149 = vunpack.c.0.s8 %v1148
  %v1150 = vlaneseq
  %v1151 = vshrl.u32 %v1150, 7
  %v1152 = vsub.s32 %v1149, %v1151
  %v1153 = vrot.slane %v1145, %v1152
  %1154 = vrot.lane.b32.xlu0 %v1153, 96
  %v1155 = vpop.permute.xlu0 %1154
  %1157 = vst.msk [vmem:[#allocation3 + $0x2] sm:$0x3] %vm1115, %v1155
  %v1158 = vld [vmem:[#allocation2 + $0x10] sm:$0x3]
  %1159 = vst.msk [vmem:[#allocation3 + $0x4] sm:$0x3] %vm1073, %v1158
  %v1160 = vld [vmem:[#allocation2 + $0x12] sm:$0x3]
  %v1163 = vunpack.c.l.s4 1983009808
  %v1164 = vunpack.c.0.s8 %v1163
  %v1165 = vlaneseq
  %v1166 = vshrl.u32 %v1165, 7
  %v1167 = vsub.s32 %v1164, %v1166
  %v1168 = vrot.slane %v1160, %v1167
  %1169 = vrot.lane.b32.xlu0 %v1168, 32
  %v1170 = vpop.permute.xlu0 %1169
  %1172 = vst.msk [vmem:[#allocation3 + $0x4] sm:$0x3] %vm1087, %v1170
  %v1173 = vld [vmem:[#allocation2 + $0x14] sm:$0x3]
  %v1176 = vunpack.c.l.s4 1983009808
  %v1177 = vunpack.c.0.s8 %v1176
  %v1178 = vlaneseq
  %v1179 = vshrl.u32 %v1178, 7
  %v1180 = vsub.s32 %v1177, %v1179
  %v1181 = vrot.slane %v1173, %v1180
  %1182 = vrot.lane.b32.xlu0 %v1181, 64
  %v1183 = vpop.permute.xlu0 %1182
  %1185 = vst.msk [vmem:[#allocation3 + $0x4] sm:$0x3] %vm1101, %v1183
  %v1186 = vld [vmem:[#allocation2 + $0x16] sm:$0x3]
  %v1189 = vunpack.c.l.s4 1983009808
  %v1190 = vunpack.c.0.s8 %v1189
  %v1191 = vlaneseq
  %v1192 = vshrl.u32 %v1191, 7
  %v1193 = vsub.s32 %v1190, %v1192
  %v1194 = vrot.slane %v1186, %v1193
  %1195 = vrot.lane.b32.xlu0 %v1194, 96
  %v1196 = vpop.permute.xlu0 %1195
  %1198 = vst.msk [vmem:[#allocation3 + $0x4] sm:$0x3] %vm1115, %v1196
  %v1199 = vld [vmem:[#allocation2 + $0x18] sm:$0x3]
  %1200 = vst.msk [vmem:[#allocation3 + $0x6] sm:$0x3] %vm1073, %v1199
  %v1201 = vld [vmem:[#allocation2 + $0x1a] sm:$0x3]
  %v1204 = vunpack.c.l.s4 1983009808
  %v1205 = vunpack.c.0.s8 %v1204
  %v1206 = vlaneseq
  %v1207 = vshrl.u32 %v1206, 7
  %v1208 = vsub.s32 %v1205, %v1207
  %v1209 = vrot.slane %v1201, %v1208
  %1210 = vrot.lane.b32.xlu0 %v1209, 32
  %v1211 = vpop.permute.xlu0 %1210
  %1213 = vst.msk [vmem:[#allocation3 + $0x6] sm:$0x3] %vm1087, %v1211
  %v1214 = vld [vmem:[#allocation2 + $0x1c] sm:$0x3]
  %v1217 = vunpack.c.l.s4 1983009808
  %v1218 = vunpack.c.0.s8 %v1217
  %v1219 = vlaneseq
  %v1220 = vshrl.u32 %v1219, 7
  %v1221 = vsub.s32 %v1218, %v1220
  %v1222 = vrot.slane %v1214, %v1221
  %1223 = vrot.lane.b32.xlu0 %v1222, 64
  %v1224 = vpop.permute.xlu0 %1223
  %1226 = vst.msk [vmem:[#allocation3 + $0x6] sm:$0x3] %vm1101, %v1224
  %v1227 = vld [vmem:[#allocation2 + $0x1e] sm:$0x3]
  %v1230 = vunpack.c.l.s4 1983009808
  %v1231 = vunpack.c.0.s8 %v1230
  %v1232 = vlaneseq
  %v1233 = vshrl.u32 %v1232, 7
  %v1234 = vsub.s32 %v1231, %v1233
  %v1235 = vrot.slane %v1227, %v1234
  %1236 = vrot.lane.b32.xlu0 %v1235, 96
  %v1237 = vpop.permute.xlu0 %1236
  %1239 = vst.msk [vmem:[#allocation3 + $0x6] sm:$0x3] %vm1115, %v1237
  %v1240 = vld [vmem:[#allocation3] sm:$0xff]
  %v1242 = vcombine.high %v1240, %v1240
  %v1244 = vunpack.c.l.s4 1983009808
  %v1245 = vunpack.c.0.s8 %v1244
  %v1246 = vlaneseq
  %v1247 = vshrl.u32 %v1246, 7
  %v1248 = vsub.s32 %v1245, %v1247
  %v1249 = vrot.slane %v1240, %v1248
  %v1251 = vunpack.c.l.s4 1983009808
  %v1252 = vunpack.c.0.s8 %v1251
  %v1253 = vlaneseq
  %v1254 = vshrl.u32 %v1253, 7
  %v1255 = vsub.s32 %v1252, %v1254
  %v1256 = vrot.slane %v1242, %v1255
  %v1257 = vcombine.high %v1249, %v1249
  %v1258 = vcombine.high %v1256, %v1256
  %v1263 = vpack.c.bf16 %v1249, %v1249
  %v1264 = vpack.c.bf16 %v1257, %v1257
  %v1265 = vpack.c.bf16 %v1256, %v1256
  %v1266 = vpack.c.bf16 %v1258, %v1258
  %v1267 = vld [vmem:[%s5] sm:$0xf]
  %v1268 = vld [vmem:[%s5 + $0x4] sm:$0xf]
  %v1269 = vld [vmem:[%s5 + $0x8] sm:$0xf]
  %v1270 = vld [vmem:[%s5 + $0xc] sm:$0xf]
  %v1271 = vld [vmem:[%s5 + $0x10] sm:$0xf]
  %v1272 = vld [vmem:[%s5 + $0x14] sm:$0xf]
  %v1273 = vld [vmem:[%s5 + $0x18] sm:$0xf]
  %v1274 = vld [vmem:[%s5 + $0x1c] sm:$0xf]
  %v1275 = vld [vmem:[%s5 + $0x20] sm:$0xf]
  %v1276 = vld [vmem:[%s5 + $0x24] sm:$0xf]
  %v1277 = vld [vmem:[%s5 + $0x28] sm:$0xf]
  %v1278 = vld [vmem:[%s5 + $0x2c] sm:$0xf]
  %v1279 = vld [vmem:[%s5 + $0x30] sm:$0xf]
  %v1280 = vld [vmem:[%s5 + $0x34] sm:$0xf]
  %v1281 = vld [vmem:[%s5 + $0x38] sm:$0xf]
  %v1282 = vld [vmem:[%s5 + $0x3c] sm:$0xf]
  %v1283 = vld [vmem:[%s5 + $0x40] sm:$0xf]
  %v1284 = vld [vmem:[%s5 + $0x44] sm:$0xf]
  %v1285 = vld [vmem:[%s5 + $0x48] sm:$0xf]
  %v1286 = vld [vmem:[%s5 + $0x4c] sm:$0xf]
  %v1287 = vld [vmem:[%s5 + $0x50] sm:$0xf]
  %v1288 = vld [vmem:[%s5 + $0x54] sm:$0xf]
  %v1289 = vld [vmem:[%s5 + $0x58] sm:$0xf]
  %v1290 = vld [vmem:[%s5 + $0x5c] sm:$0xf]
  %v1291 = vld [vmem:[%s5 + $0x60] sm:$0xf]
  %v1292 = vld [vmem:[%s5 + $0x64] sm:$0xf]
  %v1293 = vld [vmem:[%s5 + $0x68] sm:$0xf]
  %v1294 = vld [vmem:[%s5 + $0x6c] sm:$0xf]
  %v1295 = vld [vmem:[%s5 + $0x70] sm:$0xf]
  %v1296 = vld [vmem:[%s5 + $0x74] sm:$0xf]
  %v1297 = vld [vmem:[%s5 + $0x78] sm:$0xf]
  %v1298 = vld [vmem:[%s5 + $0x7c] sm:$0xf]
  %v1299 = vld [vmem:[%s5 + $0x80] sm:$0xf]
  %v1300 = vld [vmem:[%s5 + $0x84] sm:$0xf]
  %v1301 = vld [vmem:[%s5 + $0x88] sm:$0xf]
  %v1302 = vld [vmem:[%s5 + $0x8c] sm:$0xf]
  %v1303 = vld [vmem:[%s5 + $0x90] sm:$0xf]
  %v1304 = vld [vmem:[%s5 + $0x94] sm:$0xf]
  %v1305 = vld [vmem:[%s5 + $0x98] sm:$0xf]
  %v1306 = vld [vmem:[%s5 + $0x9c] sm:$0xf]
  %v1307 = vld [vmem:[%s5 + $0xa0] sm:$0xf]
  %v1308 = vld [vmem:[%s5 + $0xa4] sm:$0xf]
  %v1309 = vld [vmem:[%s5 + $0xa8] sm:$0xf]
  %v1310 = vld [vmem:[%s5 + $0xac] sm:$0xf]
  %v1311 = vld [vmem:[%s5 + $0xb0] sm:$0xf]
  %v1312 = vld [vmem:[%s5 + $0xb4] sm:$0xf]
  %v1313 = vld [vmem:[%s5 + $0xb8] sm:$0xf]
  %v1314 = vld [vmem:[%s5 + $0xbc] sm:$0xf]
  %v1315 = vld [vmem:[%s5 + $0xc0] sm:$0xf]
  %v1316 = vld [vmem:[%s5 + $0xc4] sm:$0xf]
  %v1317 = vld [vmem:[%s5 + $0xc8] sm:$0xf]
  %v1318 = vld [vmem:[%s5 + $0xcc] sm:$0xf]
  %v1319 = vld [vmem:[%s5 + $0xd0] sm:$0xf]
  %v1320 = vld [vmem:[%s5 + $0xd4] sm:$0xf]
  %v1321 = vld [vmem:[%s5 + $0xd8] sm:$0xf]
  %v1322 = vld [vmem:[%s5 + $0xdc] sm:$0xf]
  %v1323 = vld [vmem:[%s5 + $0xe0] sm:$0xf]
  %v1324 = vld [vmem:[%s5 + $0xe4] sm:$0xf]
  %v1325 = vld [vmem:[%s5 + $0xe8] sm:$0xf]
  %v1326 = vld [vmem:[%s5 + $0xec] sm:$0xf]
  %v1327 = vld [vmem:[%s5 + $0xf0] sm:$0xf]
  %v1328 = vld [vmem:[%s5 + $0xf4] sm:$0xf]
  %v1329 = vld [vmem:[%s5 + $0xf8] sm:$0xf]
  %v1330 = vld [vmem:[%s5 + $0xfc] sm:$0xf]
  %v1331 = vld [vmem:[%s6] sm:$0x1]
  %v1333 = vlaneseq
  %v1334 = vshrl.u32 %v1333, 7
  %v1335 = vsub.s32 0, %v1334
  %v1336 = vrot.slane %v1331, %v1335
  %v1402 = vunpack.c.l.b16 %v1267
  %v1403 = vunpack.c.l.b16 %v1268
  %v1404 = vunpack.c.l.b16 %v1269
  %v1405 = vunpack.c.l.b16 %v1270
  %v1406 = vunpack.c.l.b16 %v1271
  %v1407 = vunpack.c.l.b16 %v1272
  %v1408 = vunpack.c.l.b16 %v1273
  %v1409 = vunpack.c.l.b16 %v1274
  %v1410 = vunpack.c.l.b16 %v1275
  %v1411 = vunpack.c.l.b16 %v1276
  %v1412 = vunpack.c.l.b16 %v1277
  %v1413 = vunpack.c.l.b16 %v1278
  %v1414 = vunpack.c.l.b16 %v1279
  %v1415 = vunpack.c.l.b16 %v1280
  %v1416 = vunpack.c.l.b16 %v1281
  %v1417 = vunpack.c.l.b16 %v1282
  %v1418 = vunpack.c.l.b16 %v1283
  %v1419 = vunpack.c.l.b16 %v1284
  %v1420 = vunpack.c.l.b16 %v1285
  %v1421 = vunpack.c.l.b16 %v1286
  %v1422 = vunpack.c.l.b16 %v1287
  %v1423 = vunpack.c.l.b16 %v1288
  %v1424 = vunpack.c.l.b16 %v1289
  %v1425 = vunpack.c.l.b16 %v1290
  %v1426 = vunpack.c.l.b16 %v1291
  %v1427 = vunpack.c.l.b16 %v1292
  %v1428 = vunpack.c.l.b16 %v1293
  %v1429 = vunpack.c.l.b16 %v1294
  %v1430 = vunpack.c.l.b16 %v1295
  %v1431 = vunpack.c.l.b16 %v1296
  %v1432 = vunpack.c.l.b16 %v1297
  %v1433 = vunpack.c.l.b16 %v1298
  %v1434 = vunpack.c.l.b16 %v1299
  %v1435 = vunpack.c.l.b16 %v1300
  %v1436 = vunpack.c.l.b16 %v1301
  %v1437 = vunpack.c.l.b16 %v1302
  %v1438 = vunpack.c.l.b16 %v1303
  %v1439 = vunpack.c.l.b16 %v1304
  %v1440 = vunpack.c.l.b16 %v1305
  %v1441 = vunpack.c.l.b16 %v1306
  %v1442 = vunpack.c.l.b16 %v1307
  %v1443 = vunpack.c.l.b16 %v1308
  %v1444 = vunpack.c.l.b16 %v1309
  %v1445 = vunpack.c.l.b16 %v1310
  %v1446 = vunpack.c.l.b16 %v1311
  %v1447 = vunpack.c.l.b16 %v1312
  %v1448 = vunpack.c.l.b16 %v1313
  %v1449 = vunpack.c.l.b16 %v1314
  %v1450 = vunpack.c.l.b16 %v1315
  %v1451 = vunpack.c.l.b16 %v1316
  %v1452 = vunpack.c.l.b16 %v1317
  %v1453 = vunpack.c.l.b16 %v1318
  %v1454 = vunpack.c.l.b16 %v1319
  %v1455 = vunpack.c.l.b16 %v1320
  %v1456 = vunpack.c.l.b16 %v1321
  %v1457 = vunpack.c.l.b16 %v1322
  %v1458 = vunpack.c.l.b16 %v1323
  %v1459 = vunpack.c.l.b16 %v1324
  %v1460 = vunpack.c.l.b16 %v1325
  %v1461 = vunpack.c.l.b16 %v1326
  %v1462 = vunpack.c.l.b16 %v1327
  %v1463 = vunpack.c.l.b16 %v1328
  %v1464 = vunpack.c.l.b16 %v1329
  %v1465 = vunpack.c.l.b16 %v1330
  %v1466 = vpack.c.b16 %v1403, %v1402
  %v1467 = vpack.c.b16 %v1405, %v1404
  %v1468 = vpack.c.b16 %v1407, %v1406
  %v1469 = vpack.c.b16 %v1409, %v1408
  %v1470 = vpack.c.b16 %v1411, %v1410
  %v1471 = vpack.c.b16 %v1413, %v1412
  %v1472 = vpack.c.b16 %v1415, %v1414
  %v1473 = vpack.c.b16 %v1417, %v1416
  %v1474 = vpack.c.b16 %v1419, %v1418
  %v1475 = vpack.c.b16 %v1421, %v1420
  %v1476 = vpack.c.b16 %v1423, %v1422
  %v1477 = vpack.c.b16 %v1425, %v1424
  %v1478 = vpack.c.b16 %v1427, %v1426
  %v1479 = vpack.c.b16 %v1429, %v1428
  %v1480 = vpack.c.b16 %v1431, %v1430
  %v1481 = vpack.c.b16 %v1433, %v1432
  %v1482 = vpack.c.b16 %v1435, %v1434
  %v1483 = vpack.c.b16 %v1437, %v1436
  %v1484 = vpack.c.b16 %v1439, %v1438
  %v1485 = vpack.c.b16 %v1441, %v1440
  %v1486 = vpack.c.b16 %v1443, %v1442
  %v1487 = vpack.c.b16 %v1445, %v1444
  %v1488 = vpack.c.b16 %v1447, %v1446
  %v1489 = vpack.c.b16 %v1449, %v1448
  %v1490 = vpack.c.b16 %v1451, %v1450
  %v1491 = vpack.c.b16 %v1453, %v1452
  %v1492 = vpack.c.b16 %v1455, %v1454
  %v1493 = vpack.c.b16 %v1457, %v1456
  %v1494 = vpack.c.b16 %v1459, %v1458
  %v1495 = vpack.c.b16 %v1461, %v1460
  %v1496 = vpack.c.b16 %v1463, %v1462
  %v1497 = vpack.c.b16 %v1465, %v1464
  %1530 = vmatprep.subr.bf16.mxu0 0
  %1531 = vmatpush1.bf16.msra.mxu0 %v1466
  %1532 = vmatprep.subr.bf16.mxu0 0
  %1533 = vmatpush1.bf16.msra.mxu0 %v1467
  %1534 = vmatprep.subr.bf16.mxu0 0
  %1535 = vmatpush1.bf16.msra.mxu0 %v1468
  %1536 = vmatprep.subr.bf16.mxu0 0
  %1537 = vmatpush1.bf16.msra.mxu0 %v1469
  %1538 = vmatprep.subr.bf16.mxu0 0
  %1539 = vmatpush1.bf16.msra.mxu0 %v1470
  %1540 = vmatprep.subr.bf16.mxu0 0
  %1541 = vmatpush1.bf16.msra.mxu0 %v1471
  %1542 = vmatprep.subr.bf16.mxu0 0
  %1543 = vmatpush1.bf16.msra.mxu0 %v1472
  %1544 = vmatprep.subr.bf16.mxu0 0
  %1545 = vmatpush1.bf16.msra.mxu0 %v1473
  %1546 = vmatprep.subr.bf16.mxu0 0
  %1547 = vmatpush1.bf16.msra.mxu0 %v1474
  %1548 = vmatprep.subr.bf16.mxu0 0
  %1549 = vmatpush1.bf16.msra.mxu0 %v1475
  %1550 = vmatprep.subr.bf16.mxu0 0
  %1551 = vmatpush1.bf16.msra.mxu0 %v1476
  %1552 = vmatprep.subr.bf16.mxu0 0
  %1553 = vmatpush1.bf16.msra.mxu0 %v1477
  %1554 = vmatprep.subr.bf16.mxu0 0
  %1555 = vmatpush1.bf16.msra.mxu0 %v1478
  %1556 = vmatprep.subr.bf16.mxu0 0
  %1557 = vmatpush1.bf16.msra.mxu0 %v1479
  %1558 = vmatprep.subr.bf16.mxu0 0
  %1559 = vmatpush1.bf16.msra.mxu0 %v1480
  %1560 = vmatprep.subr.bf16.mxu0 0
  %1561 = vmatpush1.bf16.msra.mxu0 %v1481
  %1562 = vmatprep.mubr.bf16.mxu0 %v1264
  %1563 = vmatmul.mubr.bf16.gmra.mrb[0].mxu0 %v1263
  %v1564 = vpop.f32.mrb[0].mxu0
  %v1565 = vadd.f32 %v1336, %v1564
  %v1566 = vpop.f32.mrb[0].mxu0
  %v1567 = vpop.f32.mrb[0].mxu0
  %v1568 = vpop.f32.mrb[0].mxu0
  %1569 = vdwg.mxu0
  %1570 = vmatprep.subr.bf16.mxu0 0
  %1571 = vmatpush1.bf16.msra.mxu0 %v1482
  %1572 = vmatprep.subr.bf16.mxu0 0
  %1573 = vmatpush1.bf16.msra.mxu0 %v1483
  %1574 = vmatprep.subr.bf16.mxu0 0
  %1575 = vmatpush1.bf16.msra.mxu0 %v1484
  %1576 = vmatprep.subr.bf16.mxu0 0
  %1577 = vmatpush1.bf16.msra.mxu0 %v1485
  %1578 = vmatprep.subr.bf16.mxu0 0
  %1579 = vmatpush1.bf16.msra.mxu0 %v1486
  %1580 = vmatprep.subr.bf16.mxu0 0
  %1581 = vmatpush1.bf16.msra.mxu0 %v1487
  %1582 = vmatprep.subr.bf16.mxu0 0
  %1583 = vmatpush1.bf16.msra.mxu0 %v1488
  %1584 = vmatprep.subr.bf16.mxu0 0
  %1585 = vmatpush1.bf16.msra.mxu0 %v1489
  %1586 = vmatprep.subr.bf16.mxu0 0
  %1587 = vmatpush1.bf16.msra.mxu0 %v1490
  %1588 = vmatprep.subr.bf16.mxu0 0
  %1589 = vmatpush1.bf16.msra.mxu0 %v1491
  %1590 = vmatprep.subr.bf16.mxu0 0
  %1591 = vmatpush1.bf16.msra.mxu0 %v1492
  %1592 = vmatprep.subr.bf16.mxu0 0
  %1593 = vmatpush1.bf16.msra.mxu0 %v1493
  %1594 = vmatprep.subr.bf16.mxu0 0
  %1595 = vmatpush1.bf16.msra.mxu0 %v1494
  %1596 = vmatprep.subr.bf16.mxu0 0
  %1597 = vmatpush1.bf16.msra.mxu0 %v1495
  %1598 = vmatprep.subr.bf16.mxu0 0
  %1599 = vmatpush1.bf16.msra.mxu0 %v1496
  %1600 = vmatprep.subr.bf16.mxu0 0
  %1601 = vmatpush1.bf16.msra.mxu0 %v1497
  %1602 = vmatprep.mubr.bf16.mxu0 %v1266
  %1603 = vmatmul.mubr.bf16.gmra.mrb[0].mxu0 %v1265
  %v1604 = vpop.f32.mrb[0].mxu0
  %v1605 = vadd.f32 %v1565, %v1604
  %v1606 = vpop.f32.mrb[0].mxu0
  %v1607 = vpop.f32.mrb[0].mxu0
  %v1608 = vpop.f32.mrb[0].mxu0
  %1609 = vdwg.mxu0
  %1610 = vst [vmem:[%s7] sm:$0x3] %v1605
  // Predicated region
  $region30: #{forward.1} parent=0 // pred_check
    _
  $region31: #{forward.1} parent=0 // pred_check_branch
    %1612 = sbr.rel (0) target = $region33
  $region32: #{forward.1} parent=0 // pred_region
    _
  $region33: #{forward.1} parent=0 // pred_fallthru
    _
  // Predicated region
  $region34: #{forward.1} parent=0 // pred_check
    _
  $region35: #{forward.1} parent=0 // pred_check_branch
    %1614 = sbr.rel (0) target = $region37
  $region36: #{forward.1} parent=0 // pred_region
    _
  $region37: #{forward.1} parent=0 // pred_fallthru
    _

</llo_original>
